<compile_context>
chip_gen: v6e
topology: v6e:2x2x1
jax: 0.10.0
libtpu: 0.0.40
codegen_flags: <defaults>
</compile_context>

<pallas_src>
import functools

import jax
import jax.numpy as jnp
import numpy as np
from jax.experimental import pallas as pl
from jax.experimental.pallas import tpu as pltpu


def mha_kernel(q_ref, k_ref, v_ref, mask_ref,
               wq_ref, wk_ref, wv_ref, w0_ref,
               o_ref, *, h, d_v):
    q = q_ref[0]            # (tq, D)
    k = k_ref[0]            # (S,  D)
    v = v_ref[0]            # (S,  D)
    keep = mask_ref[0, 0] != 0   # (tq, S) bool

    # Full-width projections — one wide matmul per input instead of h skinny
    # (N = d_v) matmuls that leave the systolic array mostly empty.
    Q = jnp.dot(q, wq_ref[...], preferred_element_type=jnp.float32)  # (tq, D)
    K = jnp.dot(k, wk_ref[...], preferred_element_type=jnp.float32)  # (S,  D)
    V = jnp.dot(v, wv_ref[...], preferred_element_type=jnp.float32)  # (S,  D)

    neg_inf = jnp.float32(-1e9)

    heads = []
    for hh in range(h):                       # h is a compile-time constant
        lo = hh * d_v
        Qh = Q[:, lo:lo + d_v].astype(jnp.bfloat16)   # (tq, d_v)
        Kh = K[:, lo:lo + d_v].astype(jnp.bfloat16)   # (S,  d_v)
        Vh = V[:, lo:lo + d_v].astype(jnp.bfloat16)   # (S,  d_v)

        # scores = Qh @ Kh^T without materializing a transposed K tile:
        # contract the d_v axis of both operands.
        s = jax.lax.dot_general(
            Qh, Kh, (((1,), (1,)), ((), ())),
            preferred_element_type=jnp.float32)        # (tq, S)
        s = jnp.where(keep, s, neg_inf)

        # Softmax with deferred normalization.
        s = s - jnp.max(s, axis=-1, keepdims=True)
        p = jnp.exp(s)                                  # un-normalized probs
        denom = jnp.sum(p, axis=-1, keepdims=True)      # (tq, 1)

        oh = jnp.dot(p.astype(jnp.bfloat16), Vh,
                     preferred_element_type=jnp.float32)  # (tq, d_v)
        oh = oh * pl.reciprocal(denom, approx=True)       # EUP, ~free slot
        # dropout(attn) is identity in eval mode.
        heads.append(oh)

    concat = jnp.concatenate(heads, axis=-1)              # (tq, D) lane-dense
    # Single full-width output projection (K = D, not d_v).
    out = jnp.dot(concat, w0_ref[...], preferred_element_type=jnp.float32)
    # final_dropout is identity in eval mode.
    o_ref[0] = out.astype(o_ref.dtype)


def multi_head_attention(q, k, v, mask, wq, wk, wv, w0, h, *, q_tile=None):
    B, S, D = q.shape
    assert D % h == 0
    d_v = D // h

    if q_tile is None:
        q_tile = 256 if (S % 256 == 0) else S
    assert S % q_tile == 0
    nq = S // q_tile

    # PyTorch Linear: y = x @ W.T with W of shape (out, in). Pre-transpose to
    # input-major (D, D); the 128-multiple-friendly output dim stays last
    # (lane-dense), per-head slicing happens on activations inside the kernel.
    wq_t = wq.T
    wk_t = wk.T
    wv_t = wv.T
    w0_t = w0.T

    kernel = functools.partial(mha_kernel, h=h, d_v=d_v)

    return pl.pallas_call(
        kernel,
        out_shape=jax.ShapeDtypeStruct((B, S, D), q.dtype),
        grid_spec=pltpu.PrefetchScalarGridSpec(
            num_scalar_prefetch=0,
            grid=(B, nq),
            in_specs=[
                pl.BlockSpec((1, q_tile, D), lambda b, qi: (b, qi, 0)),      # q
                pl.BlockSpec((1, S, D), lambda b, qi: (b, 0, 0)),            # k
                pl.BlockSpec((1, S, D), lambda b, qi: (b, 0, 0)),            # v
                pl.BlockSpec((1, 1, q_tile, S), lambda b, qi: (b, 0, qi, 0)),  # mask
                pl.BlockSpec((D, D), lambda b, qi: (0, 0)),                  # Wq^T (resident)
                pl.BlockSpec((D, D), lambda b, qi: (0, 0)),                  # Wk^T
                pl.BlockSpec((D, D), lambda b, qi: (0, 0)),                  # Wv^T
                pl.BlockSpec((D, D), lambda b, qi: (0, 0)),                  # W0^T
            ],
            out_specs=pl.BlockSpec((1, q_tile, D), lambda b, qi: (b, qi, 0)),
        ),
        compiler_params=pltpu.CompilerParams(
            dimension_semantics=("parallel", "parallel")),
    )(q, k, v, mask, wq_t, wk_t, wv_t, w0_t)


def mha_reference(q, k, v, mask, wq, wk, wv, w0, h):
    """Pure-JAX mirror of the PyTorch forward (dropout = identity)."""
    B, S, D = q.shape
    d_v = D // h
    query = jnp.einsum('bsd,od->bso', q, wq, precision='highest')
    key = jnp.einsum('bsd,od->bso', k, wk, precision='highest')
    value = jnp.einsum('bsd,od->bso', v, wv, precision='highest')
    query = query.reshape(B, S, h, d_v).transpose(0, 2, 1, 3)
    key = key.reshape(B, S, h, d_v).transpose(0, 2, 1, 3)
    value = value.reshape(B, S, h, d_v).transpose(0, 2, 1, 3)
    scores = jnp.einsum('bhqd,bhkd->bhqk', query, key, precision='highest')
    scores = jnp.where(mask == 0, -1e9, scores)
    attn = jax.nn.softmax(scores, axis=-1)
    out = jnp.einsum('bhqk,bhkd->bhqd', attn, value, precision='highest')
    out = out.transpose(0, 2, 1, 3).reshape(B, S, D)
    return jnp.einsum('bsd,od->bso', out, w0, precision='highest')


if __name__ == "__main__":
    B, S, D, H = 2, 8, 32, 4

    key = jax.random.PRNGKey(0)
    k_q, k_k, k_v, k_wq, k_wk, k_wv, k_w0 = jax.random.split(key, 7)

    q = jax.random.normal(k_q, (B, S, D), dtype=jnp.float32)
    kk = jax.random.normal(k_k, (B, S, D), dtype=jnp.float32)
    vv = jax.random.normal(k_v, (B, S, D), dtype=jnp.float32)

    # Deterministic weight init mimicking nn.Linear default U(-1/sqrt(in), 1/sqrt(in)).
    bound = 1.0 / float(np.sqrt(D))
    wq = jax.random.uniform(k_wq, (D, D), jnp.float32, -bound, bound)
    wk = jax.random.uniform(k_wk, (D, D), jnp.float32, -bound, bound)
    wv = jax.random.uniform(k_wv, (D, D), jnp.float32, -bound, bound)
    w0 = jax.random.uniform(k_w0, (D, D), jnp.float32, -bound, bound)

    # Causal mask (1 = attend, 0 = masked), broadcastable to (B, H, S, S).
    mask = jnp.broadcast_to(
        jnp.tril(jnp.ones((S, S), dtype=jnp.int32))[None, None], (B, 1, S, S))

    out = multi_head_attention(q, kk, vv, mask, wq, wk, wv, w0, H)
    out = jax.block_until_ready(out)

    ref = mha_reference(q, kk, vv, mask, wq, wk, wv, w0, H)
    np.testing.assert_allclose(np.asarray(out), np.asarray(ref),
                               rtol=2e-2, atol=2e-2)

    print("KERNEL_OK")
</pallas_src>

<mosaic_0001>
module attributes {stable_mosaic.version = 11 : i64} {
  func.func @mha_kernel(%arg0: i32, %arg1: i32, %arg2: memref<1x8x32xf32, #tpu.memory_space<vmem>>, %arg3: memref<1x8x32xf32, #tpu.memory_space<vmem>>, %arg4: memref<1x8x32xf32, #tpu.memory_space<vmem>>, %arg5: memref<1x1x8x8xi32, #tpu.memory_space<vmem>>, %arg6: memref<32x32xf32, #tpu.memory_space<vmem>>, %arg7: memref<32x32xf32, #tpu.memory_space<vmem>>, %arg8: memref<32x32xf32, #tpu.memory_space<vmem>>, %arg9: memref<32x32xf32, #tpu.memory_space<vmem>>, %arg10: memref<1x8x32xf32, #tpu.memory_space<vmem>>) attributes {dimension_semantics = [#tpu.dimension_semantics<parallel>, #tpu.dimension_semantics<parallel>], iteration_bounds = array<i64: 2, 1>, scalar_prefetch = 0 : i64, scratch_operands = 0 : i64, tpu.core_type = #tpu.core_type<tc>, window_params = [{transform_indices = @transform_0, window_bounds = array<i64: 1, 8, 32>}, {transform_indices = @transform_1, window_bounds = array<i64: 1, 8, 32>}, {transform_indices = @transform_2, window_bounds = array<i64: 1, 8, 32>}, {transform_indices = @transform_3, window_bounds = array<i64: 1, 1, 8, 8>}, {pipeline_mode = #tpu.pipeline_mode<synchronous>, transform_indices = @transform_4, window_bounds = array<i64: 32, 32>}, {pipeline_mode = #tpu.pipeline_mode<synchronous>, transform_indices = @transform_5, window_bounds = array<i64: 32, 32>}, {pipeline_mode = #tpu.pipeline_mode<synchronous>, transform_indices = @transform_6, window_bounds = array<i64: 32, 32>}, {pipeline_mode = #tpu.pipeline_mode<synchronous>, transform_indices = @transform_7, window_bounds = array<i64: 32, 32>}, {transform_indices = @transform_8, window_bounds = array<i64: 1, 8, 32>}]} {
    %c0 = arith.constant 0 : index
    %c0_0 = arith.constant 0 : index
    %c0_1 = arith.constant 0 : index
    %0 = vector.load %arg2[%c0, %c0_0, %c0_1] : memref<1x8x32xf32, #tpu.memory_space<vmem>>, vector<1x8x32xf32>
    %1 = vector.shape_cast %0 : vector<1x8x32xf32> to vector<8x32xf32>
    %c0_2 = arith.constant 0 : index
    %c0_3 = arith.constant 0 : index
    %c0_4 = arith.constant 0 : index
    %2 = vector.load %arg3[%c0_2, %c0_3, %c0_4] : memref<1x8x32xf32, #tpu.memory_space<vmem>>, vector<1x8x32xf32>
    %3 = vector.shape_cast %2 : vector<1x8x32xf32> to vector<8x32xf32>
    %c0_5 = arith.constant 0 : index
    %c0_6 = arith.constant 0 : index
    %c0_7 = arith.constant 0 : index
    %4 = vector.load %arg4[%c0_5, %c0_6, %c0_7] : memref<1x8x32xf32, #tpu.memory_space<vmem>>, vector<1x8x32xf32>
    %5 = vector.shape_cast %4 : vector<1x8x32xf32> to vector<8x32xf32>
    %c0_8 = arith.constant 0 : index
    %c0_9 = arith.constant 0 : index
    %c0_10 = arith.constant 0 : index
    %c0_11 = arith.constant 0 : index
    %6 = vector.load %arg5[%c0_8, %c0_9, %c0_10, %c0_11] : memref<1x1x8x8xi32, #tpu.memory_space<vmem>>, vector<1x1x8x8xi32>
    %7 = vector.shape_cast %6 : vector<1x1x8x8xi32> to vector<8x8xi32>
    %c0_i32 = arith.constant 0 : i32
    %8 = vector.broadcast %c0_i32 : i32 to vector<8x8xi32>
    %9 = arith.cmpi ne, %7, %8 : vector<8x8xi32>
    %c0_12 = arith.constant 0 : index
    %c0_13 = arith.constant 0 : index
    %10 = vector.load %arg6[%c0_12, %c0_13] : memref<32x32xf32, #tpu.memory_space<vmem>>, vector<32x32xf32>
    %cst = arith.constant dense<0.000000e+00> : vector<8x32xf32>
    %11 = tpu.matmul %1, %10, %cst {dimension_numbers = #tpu.dot_dimension_numbers<[1], [0], [0], [1], [0, 0, 1, 1], [], []>} : vector<8x32xf32>, vector<32x32xf32>, vector<8x32xf32> -> vector<8x32xf32>
    %c0_14 = arith.constant 0 : index
    %c0_15 = arith.constant 0 : index
    %12 = vector.load %arg7[%c0_14, %c0_15] : memref<32x32xf32, #tpu.memory_space<vmem>>, vector<32x32xf32>
    %cst_16 = arith.constant dense<0.000000e+00> : vector<8x32xf32>
    %13 = tpu.matmul %3, %12, %cst_16 {dimension_numbers = #tpu.dot_dimension_numbers<[1], [0], [0], [1], [0, 0, 1, 1], [], []>} : vector<8x32xf32>, vector<32x32xf32>, vector<8x32xf32> -> vector<8x32xf32>
    %c0_17 = arith.constant 0 : index
    %c0_18 = arith.constant 0 : index
    %14 = vector.load %arg8[%c0_17, %c0_18] : memref<32x32xf32, #tpu.memory_space<vmem>>, vector<32x32xf32>
    %cst_19 = arith.constant dense<0.000000e+00> : vector<8x32xf32>
    %15 = tpu.matmul %5, %14, %cst_19 {dimension_numbers = #tpu.dot_dimension_numbers<[1], [0], [0], [1], [0, 0, 1, 1], [], []>} : vector<8x32xf32>, vector<32x32xf32>, vector<8x32xf32> -> vector<8x32xf32>
    %16 = vector.extract_strided_slice %11 {offsets = [0, 0], sizes = [8, 8], strides = [1, 1]} : vector<8x32xf32> to vector<8x8xf32>
    %17 = arith.truncf %16 : vector<8x8xf32> to vector<8x8xbf16>
    %18 = vector.extract_strided_slice %13 {offsets = [0, 0], sizes = [8, 8], strides = [1, 1]} : vector<8x32xf32> to vector<8x8xf32>
    %19 = arith.truncf %18 : vector<8x8xf32> to vector<8x8xbf16>
    %20 = vector.extract_strided_slice %15 {offsets = [0, 0], sizes = [8, 8], strides = [1, 1]} : vector<8x32xf32> to vector<8x8xf32>
    %21 = arith.truncf %20 : vector<8x8xf32> to vector<8x8xbf16>
    %cst_20 = arith.constant dense<0.000000e+00> : vector<8x8xf32>
    %22 = tpu.matmul %17, %19, %cst_20 {dimension_numbers = #tpu.dot_dimension_numbers<[1], [1], [0], [0], [0, 0, 1, 0], [], []>} : vector<8x8xbf16>, vector<8x8xbf16>, vector<8x8xf32> -> vector<8x8xf32>
    %cst_21 = arith.constant -1.000000e+09 : f32
    %23 = vector.broadcast %cst_21 : f32 to vector<8x8xf32>
    %24 = arith.select %9, %22, %23 : vector<8x8xi1>, vector<8x8xf32>
    %cst_22 = arith.constant dense<0xFF800000> : vector<8xf32>
    %25 = vector.multi_reduction <maximumf>, %24, %cst_22 [1] : vector<8x8xf32> to vector<8xf32>
    %26 = vector.shape_cast %25 : vector<8xf32> to vector<8x1xf32>
    %27 = vector.broadcast %26 : vector<8x1xf32> to vector<8x8xf32>
    %28 = arith.subf %24, %27 : vector<8x8xf32>
    %29 = math.exp %28 : vector<8x8xf32>
    %cst_23 = arith.constant dense<0.000000e+00> : vector<8xf32>
    %30 = vector.multi_reduction <add>, %29, %cst_23 [1] : vector<8x8xf32> to vector<8xf32>
    %31 = vector.shape_cast %30 : vector<8xf32> to vector<8x1xf32>
    %32 = arith.truncf %29 : vector<8x8xf32> to vector<8x8xbf16>
    %cst_24 = arith.constant dense<0.000000e+00> : vector<8x8xf32>
    %33 = tpu.matmul %32, %21, %cst_24 {dimension_numbers = #tpu.dot_dimension_numbers<[1], [0], [0], [1], [0, 0, 1, 1], [], []>} : vector<8x8xbf16>, vector<8x8xbf16>, vector<8x8xf32> -> vector<8x8xf32>
    %34 = tpu.reciprocal %31 {approx = true} : vector<8x1xf32> -> vector<8x1xf32>
    %35 = vector.broadcast %34 : vector<8x1xf32> to vector<8x8xf32>
    %36 = arith.mulf %33, %35 : vector<8x8xf32>
    %37 = vector.extract_strided_slice %11 {offsets = [0, 8], sizes = [8, 8], strides = [1, 1]} : vector<8x32xf32> to vector<8x8xf32>
    %38 = arith.truncf %37 : vector<8x8xf32> to vector<8x8xbf16>
    %39 = vector.extract_strided_slice %13 {offsets = [0, 8], sizes = [8, 8], strides = [1, 1]} : vector<8x32xf32> to vector<8x8xf32>
    %40 = arith.truncf %39 : vector<8x8xf32> to vector<8x8xbf16>
    %41 = vector.extract_strided_slice %15 {offsets = [0, 8], sizes = [8, 8], strides = [1, 1]} : vector<8x32xf32> to vector<8x8xf32>
    %42 = arith.truncf %41 : vector<8x8xf32> to vector<8x8xbf16>
    %cst_25 = arith.constant dense<0.000000e+00> : vector<8x8xf32>
    %43 = tpu.matmul %38, %40, %cst_25 {dimension_numbers = #tpu.dot_dimension_numbers<[1], [1], [0], [0], [0, 0, 1, 0], [], []>} : vector<8x8xbf16>, vector<8x8xbf16>, vector<8x8xf32> -> vector<8x8xf32>
    %cst_26 = arith.constant -1.000000e+09 : f32
    %44 = vector.broadcast %cst_26 : f32 to vector<8x8xf32>
    %45 = arith.select %9, %43, %44 : vector<8x8xi1>, vector<8x8xf32>
    %cst_27 = arith.constant dense<0xFF800000> : vector<8xf32>
    %46 = vector.multi_reduction <maximumf>, %45, %cst_27 [1] : vector<8x8xf32> to vector<8xf32>
    %47 = vector.shape_cast %46 : vector<8xf32> to vector<8x1xf32>
    %48 = vector.broadcast %47 : vector<8x1xf32> to vector<8x8xf32>
    %49 = arith.subf %45, %48 : vector<8x8xf32>
    %50 = math.exp %49 : vector<8x8xf32>
    %cst_28 = arith.constant dense<0.000000e+00> : vector<8xf32>
    %51 = vector.multi_reduction <add>, %50, %cst_28 [1] : vector<8x8xf32> to vector<8xf32>
    %52 = vector.shape_cast %51 : vector<8xf32> to vector<8x1xf32>
    %53 = arith.truncf %50 : vector<8x8xf32> to vector<8x8xbf16>
    %cst_29 = arith.constant dense<0.000000e+00> : vector<8x8xf32>
    %54 = tpu.matmul %53, %42, %cst_29 {dimension_numbers = #tpu.dot_dimension_numbers<[1], [0], [0], [1], [0, 0, 1, 1], [], []>} : vector<8x8xbf16>, vector<8x8xbf16>, vector<8x8xf32> -> vector<8x8xf32>
    %55 = tpu.reciprocal %52 {approx = true} : vector<8x1xf32> -> vector<8x1xf32>
    %56 = vector.broadcast %55 : vector<8x1xf32> to vector<8x8xf32>
    %57 = arith.mulf %54, %56 : vector<8x8xf32>
    %58 = vector.extract_strided_slice %11 {offsets = [0, 16], sizes = [8, 8], strides = [1, 1]} : vector<8x32xf32> to vector<8x8xf32>
    %59 = arith.truncf %58 : vector<8x8xf32> to vector<8x8xbf16>
    %60 = vector.extract_strided_slice %13 {offsets = [0, 16], sizes = [8, 8], strides = [1, 1]} : vector<8x32xf32> to vector<8x8xf32>
    %61 = arith.truncf %60 : vector<8x8xf32> to vector<8x8xbf16>
    %62 = vector.extract_strided_slice %15 {offsets = [0, 16], sizes = [8, 8], strides = [1, 1]} : vector<8x32xf32> to vector<8x8xf32>
    %63 = arith.truncf %62 : vector<8x8xf32> to vector<8x8xbf16>
    %cst_30 = arith.constant dense<0.000000e+00> : vector<8x8xf32>
    %64 = tpu.matmul %59, %61, %cst_30 {dimension_numbers = #tpu.dot_dimension_numbers<[1], [1], [0], [0], [0, 0, 1, 0], [], []>} : vector<8x8xbf16>, vector<8x8xbf16>, vector<8x8xf32> -> vector<8x8xf32>
    %cst_31 = arith.constant -1.000000e+09 : f32
    %65 = vector.broadcast %cst_31 : f32 to vector<8x8xf32>
    %66 = arith.select %9, %64, %65 : vector<8x8xi1>, vector<8x8xf32>
    %cst_32 = arith.constant dense<0xFF800000> : vector<8xf32>
    %67 = vector.multi_reduction <maximumf>, %66, %cst_32 [1] : vector<8x8xf32> to vector<8xf32>
    %68 = vector.shape_cast %67 : vector<8xf32> to vector<8x1xf32>
    %69 = vector.broadcast %68 : vector<8x1xf32> to vector<8x8xf32>
    %70 = arith.subf %66, %69 : vector<8x8xf32>
    %71 = math.exp %70 : vector<8x8xf32>
    %cst_33 = arith.constant dense<0.000000e+00> : vector<8xf32>
    %72 = vector.multi_reduction <add>, %71, %cst_33 [1] : vector<8x8xf32> to vector<8xf32>
    %73 = vector.shape_cast %72 : vector<8xf32> to vector<8x1xf32>
    %74 = arith.truncf %71 : vector<8x8xf32> to vector<8x8xbf16>
    %cst_34 = arith.constant dense<0.000000e+00> : vector<8x8xf32>
    %75 = tpu.matmul %74, %63, %cst_34 {dimension_numbers = #tpu.dot_dimension_numbers<[1], [0], [0], [1], [0, 0, 1, 1], [], []>} : vector<8x8xbf16>, vector<8x8xbf16>, vector<8x8xf32> -> vector<8x8xf32>
    %76 = tpu.reciprocal %73 {approx = true} : vector<8x1xf32> -> vector<8x1xf32>
    %77 = vector.broadcast %76 : vector<8x1xf32> to vector<8x8xf32>
    %78 = arith.mulf %75, %77 : vector<8x8xf32>
    %79 = vector.extract_strided_slice %11 {offsets = [0, 24], sizes = [8, 8], strides = [1, 1]} : vector<8x32xf32> to vector<8x8xf32>
    %80 = arith.truncf %79 : vector<8x8xf32> to vector<8x8xbf16>
    %81 = vector.extract_strided_slice %13 {offsets = [0, 24], sizes = [8, 8], strides = [1, 1]} : vector<8x32xf32> to vector<8x8xf32>
    %82 = arith.truncf %81 : vector<8x8xf32> to vector<8x8xbf16>
    %83 = vector.extract_strided_slice %15 {offsets = [0, 24], sizes = [8, 8], strides = [1, 1]} : vector<8x32xf32> to vector<8x8xf32>
    %84 = arith.truncf %83 : vector<8x8xf32> to vector<8x8xbf16>
    %cst_35 = arith.constant dense<0.000000e+00> : vector<8x8xf32>
    %85 = tpu.matmul %80, %82, %cst_35 {dimension_numbers = #tpu.dot_dimension_numbers<[1], [1], [0], [0], [0, 0, 1, 0], [], []>} : vector<8x8xbf16>, vector<8x8xbf16>, vector<8x8xf32> -> vector<8x8xf32>
    %cst_36 = arith.constant -1.000000e+09 : f32
    %86 = vector.broadcast %cst_36 : f32 to vector<8x8xf32>
    %87 = arith.select %9, %85, %86 : vector<8x8xi1>, vector<8x8xf32>
    %cst_37 = arith.constant dense<0xFF800000> : vector<8xf32>
    %88 = vector.multi_reduction <maximumf>, %87, %cst_37 [1] : vector<8x8xf32> to vector<8xf32>
    %89 = vector.shape_cast %88 : vector<8xf32> to vector<8x1xf32>
    %90 = vector.broadcast %89 : vector<8x1xf32> to vector<8x8xf32>
    %91 = arith.subf %87, %90 : vector<8x8xf32>
    %92 = math.exp %91 : vector<8x8xf32>
    %cst_38 = arith.constant dense<0.000000e+00> : vector<8xf32>
    %93 = vector.multi_reduction <add>, %92, %cst_38 [1] : vector<8x8xf32> to vector<8xf32>
    %94 = vector.shape_cast %93 : vector<8xf32> to vector<8x1xf32>
    %95 = arith.truncf %92 : vector<8x8xf32> to vector<8x8xbf16>
    %cst_39 = arith.constant dense<0.000000e+00> : vector<8x8xf32>
    %96 = tpu.matmul %95, %84, %cst_39 {dimension_numbers = #tpu.dot_dimension_numbers<[1], [0], [0], [1], [0, 0, 1, 1], [], []>} : vector<8x8xbf16>, vector<8x8xbf16>, vector<8x8xf32> -> vector<8x8xf32>
    %97 = tpu.reciprocal %94 {approx = true} : vector<8x1xf32> -> vector<8x1xf32>
    %98 = vector.broadcast %97 : vector<8x1xf32> to vector<8x8xf32>
    %99 = arith.mulf %96, %98 : vector<8x8xf32>
    %100 = tpu.concatenate %36, %57, %78, %99 in 1 : vector<8x8xf32>, vector<8x8xf32>, vector<8x8xf32>, vector<8x8xf32> -> vector<8x32xf32>
    %c0_40 = arith.constant 0 : index
    %c0_41 = arith.constant 0 : index
    %101 = vector.load %arg9[%c0_40, %c0_41] : memref<32x32xf32, #tpu.memory_space<vmem>>, vector<32x32xf32>
    %cst_42 = arith.constant dense<0.000000e+00> : vector<8x32xf32>
    %102 = tpu.matmul %100, %101, %cst_42 {dimension_numbers = #tpu.dot_dimension_numbers<[1], [0], [0], [1], [0, 0, 1, 1], [], []>} : vector<8x32xf32>, vector<32x32xf32>, vector<8x32xf32> -> vector<8x32xf32>
    %c0_43 = arith.constant 0 : index
    %c0_44 = arith.constant 0 : index
    %c0_45 = arith.constant 0 : index
    %103 = vector.load %arg10[%c0_43, %c0_44, %c0_45] : memref<1x8x32xf32, #tpu.memory_space<vmem>>, vector<1x8x32xf32>
    %104 = vector.shape_cast %103 : vector<1x8x32xf32> to vector<8x32xf32>
    %105 = vector.shape_cast %102 : vector<8x32xf32> to vector<1x8x32xf32>
    tpu.vector_store %arg10[%c0_43, %c0_44, %c0_45], %105 {strides = array<i32>} : memref<1x8x32xf32, #tpu.memory_space<vmem>>, vector<1x8x32xf32>,
    return
  }
  func.func @transform_0(%arg0: i32, %arg1: i32) -> (i32, i32, i32) {
    %c0_i32 = arith.constant 0 : i32
    %c0_i32_0 = arith.constant 0 : i32
    return %arg0, %arg1, %c0_i32 : i32, i32, i32
  }
  func.func @transform_1(%arg0: i32, %arg1: i32) -> (i32, i32, i32) {
    %c0_i32 = arith.constant 0 : i32
    %c0_i32_0 = arith.constant 0 : i32
    %c0_i32_1 = arith.constant 0 : i32
    return %arg0, %c0_i32, %c0_i32_0 : i32, i32, i32
  }
  func.func @transform_2(%arg0: i32, %arg1: i32) -> (i32, i32, i32) {
    %c0_i32 = arith.constant 0 : i32
    %c0_i32_0 = arith.constant 0 : i32
    %c0_i32_1 = arith.constant 0 : i32
    return %arg0, %c0_i32, %c0_i32_0 : i32, i32, i32
  }
  func.func @transform_3(%arg0: i32, %arg1: i32) -> (i32, i32, i32, i32) {
    %c0_i32 = arith.constant 0 : i32
    %c0_i32_0 = arith.constant 0 : i32
    %c0_i32_1 = arith.constant 0 : i32
    return %arg0, %c0_i32, %arg1, %c0_i32_0 : i32, i32, i32, i32
  }
  func.func @transform_4(%arg0: i32, %arg1: i32) -> (i32, i32) {
    %c0_i32 = arith.constant 0 : i32
    %c0_i32_0 = arith.constant 0 : i32
    %c0_i32_1 = arith.constant 0 : i32
    return %c0_i32, %c0_i32_0 : i32, i32
  }
  func.func @transform_5(%arg0: i32, %arg1: i32) -> (i32, i32) {
    %c0_i32 = arith.constant 0 : i32
    %c0_i32_0 = arith.constant 0 : i32
    %c0_i32_1 = arith.constant 0 : i32
    return %c0_i32, %c0_i32_0 : i32, i32
  }
  func.func @transform_6(%arg0: i32, %arg1: i32) -> (i32, i32) {
    %c0_i32 = arith.constant 0 : i32
    %c0_i32_0 = arith.constant 0 : i32
    %c0_i32_1 = arith.constant 0 : i32
    return %c0_i32, %c0_i32_0 : i32, i32
  }
  func.func @transform_7(%arg0: i32, %arg1: i32) -> (i32, i32) {
    %c0_i32 = arith.constant 0 : i32
    %c0_i32_0 = arith.constant 0 : i32
    %c0_i32_1 = arith.constant 0 : i32
    return %c0_i32, %c0_i32_0 : i32, i32
  }
  func.func @transform_8(%arg0: i32, %arg1: i32) -> (i32, i32, i32) {
    %c0_i32 = arith.constant 0 : i32
    %c0_i32_0 = arith.constant 0 : i32
    return %arg0, %arg1, %c0_i32 : i32, i32, i32
  }
}

</mosaic_0001>

<llo_original>
// kernel: tpu_custom_call.1
$region0: #{tpu_custom_call.1}
  #allocation0 [shape = 'u32[]', space=smem, size = 0x4, offset = 0x4, fixed_abs, tag = 'smem constant byte address 0x4 - core index']
  #allocation1 [shape = 'u32[144,128]{1,0:T(1,128)}', space=vmem, size = 0x12000, scoped, tag = 'internal scratch']
  %s0 = inlined_call_operand.hbm [shape: f32[2,8,32], index: 0, kind: input, shape index: {}]
  %s1 = inlined_call_operand.hbm [shape: f32[2,8,32], index: 1, kind: input, shape index: {}]
  %s2 = inlined_call_operand.hbm [shape: f32[2,8,32], index: 2, kind: input, shape index: {}]
  %s3 = inlined_call_operand.hbm [shape: s32[2,1,8,8], index: 3, kind: input, shape index: {}]
  %s4 = inlined_call_operand.hbm [shape: f32[32,32], index: 4, kind: input, shape index: {}]
  %s5 = inlined_call_operand.hbm [shape: f32[32,32], index: 5, kind: input, shape index: {}]
  %s6 = inlined_call_operand.hbm [shape: f32[32,32], index: 6, kind: input, shape index: {}]
  %s7 = inlined_call_operand.hbm [shape: f32[32,32], index: 7, kind: input, shape index: {}]
  %s8 = inlined_call_operand.hbm [shape: f32[2,8,32], index: 8, kind: output, shape index: {}]
  %s9 = sld [smem:[#allocation0]]
  $region97: #{tpu_custom_call.1} parent=0
    _
  %s11 = ssub.s32 1, %s9
  %s12 = scalar_select 0, %s11, %s9
  $region1: #{tpu_custom_call.1} parent=0
    #allocation2 [shape = 'u8[8192]{0}', space=vmem, size = 0x2000, scoped, tag = 'input window, operand 0']
    #allocation3 [shape = 's32[2]{0}', space=sflag, size = 0x8, scoped, tag = 'scoped memory for tpu_custom_call.1']
    #allocation4 [shape = 's32[2]{0}', space=sflag, size = 0x8, scoped, tag = 'scoped memory for tpu_custom_call.1']
    #allocation5 [shape = 'u8[8192]{0}', space=vmem, size = 0x2000, scoped, tag = 'input window, operand 1']
    #allocation6 [shape = 's32[2]{0}', space=sflag, size = 0x8, scoped, tag = 'scoped memory for tpu_custom_call.1']
    #allocation7 [shape = 'u8[8192]{0}', space=vmem, size = 0x2000, scoped, tag = 'input window, operand 2']
    #allocation8 [shape = 'u8[8192]{0}', space=vmem, size = 0x2000, scoped, tag = 'input window, operand 3']
    #allocation9 [shape = 's32[2]{0}', space=sflag, size = 0x8, scoped, tag = 'scoped memory for tpu_custom_call.1']
    #allocation10 [shape = 'u8[16384]{0}', space=vmem, size = 0x4000, scoped, tag = 'input window, operand 4, single buffered']
    #allocation11 [shape = 'u8[16384]{0}', space=vmem, size = 0x4000, scoped, tag = 'input window, operand 5, single buffered']
    #allocation12 [shape = 's32[1]{0}', space=sflag, size = 0x4, scoped, tag = 'scoped memory for tpu_custom_call.1']
    #allocation13 [shape = 'u8[16384]{0}', space=vmem, size = 0x4000, scoped, tag = 'input window, operand 6, single buffered']
    #allocation14 [shape = 'u8[16384]{0}', space=vmem, size = 0x4000, scoped, tag = 'input window, operand 7, single buffered']
    #allocation15 [shape = 's32[1]{0}', space=sflag, size = 0x4, scoped, tag = 'scoped memory for tpu_custom_call.1']
    #allocation16 [shape = 'u8[8192]{0}', space=vmem, size = 0x2000, scoped, tag = 'output window, operand 0']
    %13 = vsyncpa [#allocation3], 0
    %s14 = scalar_lea.sflag [#allocation3], 1
    %15 = vsyncpa %s14, 0
    %16 = vsyncpa [#allocation6], 0
    %s17 = scalar_lea.sflag [#allocation6], 1
    %18 = vsyncpa %s17, 0
    %19 = vsyncpa [#allocation9], 0
    %s20 = scalar_lea.sflag [#allocation9], 1
    %21 = vsyncpa %s20, 0
    %22 = vsyncpa [#allocation12], 0
    %23 = vsyncpa [#allocation15], 0
    %24 = vsyncpa [#allocation4], 0
    %s25 = scalar_lea.sflag [#allocation4], 1
    %26 = vsyncpa %s25, 0
    loop: start=0, step=1, limit=4
    $region2: #{tpu_custom_call.1} parent=1 // loop_pre_header
      _
    $region3: #{tpu_custom_call.1} parent=1 // loop_header
      %s28 = sphi 0, %s32
      %p29 = scmp.ge.s32.totalorder %s28, 4
      %s35 = sphi 0, %s47
      %s36 = sphi 0, %s43
      %s37 = sphi 0, %s35
      %s38 = sphi 0, %s36
      %s39 = sphi 0, %s37
      %s40 = sphi 0, %s38
      %s52 = sphi 0, %s54
      %s55 = sphi 0, %s52
      %s56 = sphi 0, %s55
      %s72 = sphi 0, %s56
      %s78 = sphi 0, %s80
      %s81 = sphi 0, %s78
      %s82 = sphi 0, %s81
      %s98 = sphi 0, %s82
      %s104 = sphi 0, %s106
      %s107 = sphi 0, %s104
      %s108 = sphi 0, %s107
      %s124 = sphi 0, %s108
      %s132 = sphi 0, %s134
      %s135 = sphi 0, %s132
      %s136 = sphi 0, %s135
      %s152 = sphi 0, %s136
      %s156 = sphi 0, %s156
      %s158 = sphi 0, %s156
      %s159 = sphi 0, %s158
      %s173 = sphi 0, %s159
      %s177 = sphi 0, %s177
      %s179 = sphi 0, %s177
      %s180 = sphi 0, %s179
      %s194 = sphi 0, %s180
      %s198 = sphi 0, %s198
      %s200 = sphi 0, %s198
      %s201 = sphi 0, %s200
      %s215 = sphi 0, %s201
      %s219 = sphi 0, %s219
      %s221 = sphi 0, %s219
      %s222 = sphi 0, %s221
      %s236 = sphi 0, %s222
      %s244 = sphi 0, %s246
      %s247 = sphi 0, %s244
      %s248 = sphi 0, %s247
      %s264 = sphi 0, %s248
    $region4: #{tpu_custom_call.1} parent=1 // loop_header_branch
      %31 = sbr.rel (%p29) target = $region8
    $region5: #{tpu_custom_call.1} parent=1 // loop_body
      %s33 = ssub.s32 %s28, 1
      %s34 = ssub.s32 %s28, 2
      %s41 = sadd.s32 1, %s36
      %p42 = scmp.ge.s32.totalorder %s41, 1
      %s43 = scalar_select %p42, 0, %s41
      %s44 = sadd.s32 1, %s35
      %s45 = scalar_select %p42, %s44, %s35
      %p46 = scmp.ge.s32.totalorder %s45, 2
      %s47 = scalar_select %p46, 0, %s45
      %s48 = ssub.s32 %s35, %s47
      %s49 = ssub.s32 %s36, %s43
      %s50 = sor.u32 %s48, %s49
      %p51 = scmp.eq.s32.totalorder %s50, 0
      %s53 = sadd.s32 %s52, 1
      %s54 = scalar_select %p51, %s52, %s53
      %p57 = pneg %p51
      %p58 = scmp.eq.s32.totalorder %s28, 1
      %p59 = por %p57, %p58
      %p60 = scmp.ne.s32.totalorder %s52, %s55
      %p61 = scmp.eq.s32.totalorder %s28, 0
      %p62 = por %p60, %p61
      %p63 = scmp.ne.s32.totalorder %s52, %s55
      %p64 = scmp.eq.s32.totalorder %s33, 1
      %p65 = por %p63, %p64
      %p66 = scmp.ne.s32.totalorder %s55, %s56
      %p67 = scmp.eq.s32.totalorder %s33, 0
      %p68 = por %p66, %p67
      %p69 = scmp.ne.s32.totalorder %s55, %s56
      %p70 = scmp.eq.s32.totalorder %s34, 1
      %p71 = por %p69, %p70
      %p73 = scmp.ne.s32.totalorder %s56, %s72
      %p74 = scmp.eq.s32.totalorder %s34, 0
      %p75 = por %p73, %p74
      %s76 = ssub.s32 %s35, %s47
      %p77 = scmp.eq.s32.totalorder %s76, 0
      %s79 = sadd.s32 %s78, 1
      %s80 = scalar_select %p77, %s78, %s79
      %p83 = pneg %p77
      %p84 = scmp.eq.s32.totalorder %s28, 1
      %p85 = por %p83, %p84
      %p86 = scmp.ne.s32.totalorder %s78, %s81
      %p87 = scmp.eq.s32.totalorder %s28, 0
      %p88 = por %p86, %p87
      %p89 = scmp.ne.s32.totalorder %s78, %s81
      %p90 = scmp.eq.s32.totalorder %s33, 1
      %p91 = por %p89, %p90
      %p92 = scmp.ne.s32.totalorder %s81, %s82
      %p93 = scmp.eq.s32.totalorder %s33, 0
      %p94 = por %p92, %p93
      %p95 = scmp.ne.s32.totalorder %s81, %s82
      %p96 = scmp.eq.s32.totalorder %s34, 1
      %p97 = por %p95, %p96
      %p99 = scmp.ne.s32.totalorder %s82, %s98
      %p100 = scmp.eq.s32.totalorder %s34, 0
      %p101 = por %p99, %p100
      %s102 = ssub.s32 %s35, %s47
      %p103 = scmp.eq.s32.totalorder %s102, 0
      %s105 = sadd.s32 %s104, 1
      %s106 = scalar_select %p103, %s104, %s105
      %p109 = pneg %p103
      %p110 = scmp.eq.s32.totalorder %s28, 1
      %p111 = por %p109, %p110
      %p112 = scmp.ne.s32.totalorder %s104, %s107
      %p113 = scmp.eq.s32.totalorder %s28, 0
      %p114 = por %p112, %p113
      %p115 = scmp.ne.s32.totalorder %s104, %s107
      %p116 = scmp.eq.s32.totalorder %s33, 1
      %p117 = por %p115, %p116
      %p118 = scmp.ne.s32.totalorder %s107, %s108
      %p119 = scmp.eq.s32.totalorder %s33, 0
      %p120 = por %p118, %p119
      %p121 = scmp.ne.s32.totalorder %s107, %s108
      %p122 = scmp.eq.s32.totalorder %s34, 1
      %p123 = por %p121, %p122
      %p125 = scmp.ne.s32.totalorder %s108, %s124
      %p126 = scmp.eq.s32.totalorder %s34, 0
      %p127 = por %p125, %p126
      %s128 = ssub.s32 %s35, %s47
      %s129 = ssub.s32 %s36, %s43
      %s130 = sor.u32 %s128, %s129
      %p131 = scmp.eq.s32.totalorder %s130, 0
      %s133 = sadd.s32 %s132, 1
      %s134 = scalar_select %p131, %s132, %s133
      %p137 = pneg %p131
      %p138 = scmp.eq.s32.totalorder %s28, 1
      %p139 = por %p137, %p138
      %p140 = scmp.ne.s32.totalorder %s132, %s135
      %p141 = scmp.eq.s32.totalorder %s28, 0
      %p142 = por %p140, %p141
      %p143 = scmp.ne.s32.totalorder %s132, %s135
      %p144 = scmp.eq.s32.totalorder %s33, 1
      %p145 = por %p143, %p144
      %p146 = scmp.ne.s32.totalorder %s135, %s136
      %p147 = scmp.eq.s32.totalorder %s33, 0
      %p148 = por %p146, %p147
      %p149 = scmp.ne.s32.totalorder %s135, %s136
      %p150 = scmp.eq.s32.totalorder %s34, 1
      %p151 = por %p149, %p150
      %p153 = scmp.ne.s32.totalorder %s136, %s152
      %p154 = scmp.eq.s32.totalorder %s34, 0
      %p155 = por %p153, %p154
      %s157 = sadd.s32 %s156, 1
      %p160 = scmp.eq.s32.totalorder %s28, 1
      %p161 = scmp.ne.s32.totalorder %s156, %s158
      %p162 = scmp.eq.s32.totalorder %s28, 0
      %p163 = por %p161, %p162
      %p164 = scmp.ne.s32.totalorder %s156, %s158
      %p165 = scmp.eq.s32.totalorder %s33, 1
      %p166 = por %p164, %p165
      %p167 = scmp.ne.s32.totalorder %s158, %s159
      %p168 = scmp.eq.s32.totalorder %s33, 0
      %p169 = por %p167, %p168
      %p170 = scmp.ne.s32.totalorder %s158, %s159
      %p171 = scmp.eq.s32.totalorder %s34, 1
      %p172 = por %p170, %p171
      %p174 = scmp.ne.s32.totalorder %s159, %s173
      %p175 = scmp.eq.s32.totalorder %s34, 0
      %p176 = por %p174, %p175
      %s178 = sadd.s32 %s177, 1
      %p181 = scmp.eq.s32.totalorder %s28, 1
      %p182 = scmp.ne.s32.totalorder %s177, %s179
      %p183 = scmp.eq.s32.totalorder %s28, 0
      %p184 = por %p182, %p183
      %p185 = scmp.ne.s32.totalorder %s177, %s179
      %p186 = scmp.eq.s32.totalorder %s33, 1
      %p187 = por %p185, %p186
      %p188 = scmp.ne.s32.totalorder %s179, %s180
      %p189 = scmp.eq.s32.totalorder %s33, 0
      %p190 = por %p188, %p189
      %p191 = scmp.ne.s32.totalorder %s179, %s180
      %p192 = scmp.eq.s32.totalorder %s34, 1
      %p193 = por %p191, %p192
      %p195 = scmp.ne.s32.totalorder %s180, %s194
      %p196 = scmp.eq.s32.totalorder %s34, 0
      %p197 = por %p195, %p196
      %s199 = sadd.s32 %s198, 1
      %p202 = scmp.eq.s32.totalorder %s28, 1
      %p203 = scmp.ne.s32.totalorder %s198, %s200
      %p204 = scmp.eq.s32.totalorder %s28, 0
      %p205 = por %p203, %p204
      %p206 = scmp.ne.s32.totalorder %s198, %s200
      %p207 = scmp.eq.s32.totalorder %s33, 1
      %p208 = por %p206, %p207
      %p209 = scmp.ne.s32.totalorder %s200, %s201
      %p210 = scmp.eq.s32.totalorder %s33, 0
      %p211 = por %p209, %p210
      %p212 = scmp.ne.s32.totalorder %s200, %s201
      %p213 = scmp.eq.s32.totalorder %s34, 1
      %p214 = por %p212, %p213
      %p216 = scmp.ne.s32.totalorder %s201, %s215
      %p217 = scmp.eq.s32.totalorder %s34, 0
      %p218 = por %p216, %p217
      %s220 = sadd.s32 %s219, 1
      %p223 = scmp.eq.s32.totalorder %s28, 1
      %p224 = scmp.ne.s32.totalorder %s219, %s221
      %p225 = scmp.eq.s32.totalorder %s28, 0
      %p226 = por %p224, %p225
      %p227 = scmp.ne.s32.totalorder %s219, %s221
      %p228 = scmp.eq.s32.totalorder %s33, 1
      %p229 = por %p227, %p228
      %p230 = scmp.ne.s32.totalorder %s221, %s222
      %p231 = scmp.eq.s32.totalorder %s33, 0
      %p232 = por %p230, %p231
      %p233 = scmp.ne.s32.totalorder %s221, %s222
      %p234 = scmp.eq.s32.totalorder %s34, 1
      %p235 = por %p233, %p234
      %p237 = scmp.ne.s32.totalorder %s222, %s236
      %p238 = scmp.eq.s32.totalorder %s34, 0
      %p239 = por %p237, %p238
      %s240 = ssub.s32 %s35, %s47
      %s241 = ssub.s32 %s36, %s43
      %s242 = sor.u32 %s240, %s241
      %p243 = scmp.eq.s32.totalorder %s242, 0
      %s245 = sadd.s32 %s244, 1
      %s246 = scalar_select %p243, %s244, %s245
      %p249 = pneg %p243
      %p250 = scmp.eq.s32.totalorder %s28, 1
      %p251 = por %p249, %p250
      %p252 = scmp.ne.s32.totalorder %s244, %s247
      %p253 = scmp.eq.s32.totalorder %s28, 0
      %p254 = por %p252, %p253
      %p255 = scmp.ne.s32.totalorder %s244, %s247
      %p256 = scmp.eq.s32.totalorder %s33, 1
      %p257 = por %p255, %p256
      %p258 = scmp.ne.s32.totalorder %s247, %s248
      %p259 = scmp.eq.s32.totalorder %s33, 0
      %p260 = por %p258, %p259
      %p261 = scmp.ne.s32.totalorder %s247, %s248
      %p262 = scmp.eq.s32.totalorder %s34, 1
      %p263 = por %p261, %p262
      %p265 = scmp.ne.s32.totalorder %s248, %s264
      %p266 = scmp.eq.s32.totalorder %s34, 0
      %p267 = por %p265, %p266
      %p268 = scmp.le.s32.totalorder 1, %s28
      %p269 = scmp.lt.s32.totalorder %s28, 3
      %p270 = pnand %p268, %p269
      %p271 = pneg %p270
      // Predicated region
      $region9: #{tpu_custom_call.1} parent=5 // pred_check
        _
      $region10: #{tpu_custom_call.1} parent=5 // pred_check_branch
        %273 = sbr.rel (%p270) target = $region12
      $region11: #{tpu_custom_call.1} parent=5 // pred_region
        %s274 = ssub.s32 %s28, 1
        // Predicated region
        $region13: #{tpu_custom_call.1} parent=11 // pred_check
          %p275 = pneg %p169
        $region14: #{tpu_custom_call.1} parent=11 // pred_check_branch
          %277 = sbr.rel (%p275) target = $region16
        $region15: #{tpu_custom_call.1} parent=11 // pred_region
          %s279 = ssub.s32 512, 512
          %280 = vsyncadd [#allocation9], %s279
          %s281 = sshll.u32 [#allocation10], 4
          %s282 = int_to_ptr.vmem [resolvable:$true] %s281
          %287 = dma.hbm_to_vmem [thread:$0]  %s4, 512, %s282, [#allocation9], 128, 128, 8
        $region16: #{tpu_custom_call.1} parent=11 // pred_fallthru
          _
        // Predicated region
        $region17: #{tpu_custom_call.1} parent=11 // pred_check
          %p288 = pneg %p190
        $region18: #{tpu_custom_call.1} parent=11 // pred_check_branch
          %290 = sbr.rel (%p288) target = $region20
        $region19: #{tpu_custom_call.1} parent=11 // pred_region
          %s292 = ssub.s32 512, 512
          %293 = vsyncadd [#allocation12], %s292
          %s294 = sshll.u32 [#allocation11], 4
          %s295 = int_to_ptr.vmem [resolvable:$true] %s294
          %300 = dma.hbm_to_vmem [thread:$0]  %s5, 512, %s295, [#allocation12], 128, 128, 8
        $region20: #{tpu_custom_call.1} parent=11 // pred_fallthru
          _
        // Predicated region
        $region21: #{tpu_custom_call.1} parent=11 // pred_check
          %p301 = pneg %p211
        $region22: #{tpu_custom_call.1} parent=11 // pred_check_branch
          %303 = sbr.rel (%p301) target = $region24
        $region23: #{tpu_custom_call.1} parent=11 // pred_region
          %s305 = ssub.s32 512, 512
          %306 = vsyncadd [#allocation12], %s305
          %s307 = sshll.u32 [#allocation13], 4
          %s308 = int_to_ptr.vmem [resolvable:$true] %s307
          %313 = dma.hbm_to_vmem [thread:$0]  %s6, 512, %s308, [#allocation12], 128, 128, 8
        $region24: #{tpu_custom_call.1} parent=11 // pred_fallthru
          _
        // Predicated region
        $region25: #{tpu_custom_call.1} parent=11 // pred_check
          %p314 = pneg %p232
        $region26: #{tpu_custom_call.1} parent=11 // pred_check_branch
          %316 = sbr.rel (%p314) target = $region28
        $region27: #{tpu_custom_call.1} parent=11 // pred_region
          %s318 = ssub.s32 512, 512
          %319 = vsyncadd [#allocation15], %s318
          %s320 = sshll.u32 [#allocation14], 4
          %s321 = int_to_ptr.vmem [resolvable:$true] %s320
          %326 = dma.hbm_to_vmem [thread:$0]  %s7, 512, %s321, [#allocation15], 128, 128, 8
        $region28: #{tpu_custom_call.1} parent=11 // pred_fallthru
          _
      $region12: #{tpu_custom_call.1} parent=5 // pred_fallthru
        _
      %p327 = scmp.lt.s32.totalorder %s28, 2
      // Predicated region
      $region29: #{tpu_custom_call.1} parent=5 // pred_check
        %p328 = pneg %p327
      $region30: #{tpu_custom_call.1} parent=5 // pred_check_branch
        %330 = sbr.rel (%p328) target = $region32
      $region31: #{tpu_custom_call.1} parent=5 // pred_region
        // Predicated region
        $region33: #{tpu_custom_call.1} parent=31 // pred_check
          %p331 = pneg %p62
        $region34: #{tpu_custom_call.1} parent=31 // pred_check_branch
          %333 = sbr.rel (%p331) target = $region36
        $region35: #{tpu_custom_call.1} parent=31 // pred_region
          %s334 = sand.u32 %s52, 1
          %s335 = scalar_lea.sflag [#allocation3], %s334
          %s336 = sand.u32 %s52, 1
          %s337 = smul.addr %s336, 8
          %s338 = scalar_lea.vmem [#allocation2], %s337
          %s340 = ssub.s32 128, 128
          %341 = vsyncadd %s335, %s340
          %s342 = sadd.s32 %s36, %s35
          %s343 = smul.addr %s342, 128
          %s344 = scalar_lea.hbm %s0, %s343
          %s346 = sshll.u32 %s338, 4
          %s347 = int_to_ptr.vmem [resolvable:$true] %s346
          %349 = dma.hbm_to_vmem [thread:$0]  %s344, 128, %s347, %s335
        $region36: #{tpu_custom_call.1} parent=31 // pred_fallthru
          _
        // Predicated region
        $region37: #{tpu_custom_call.1} parent=31 // pred_check
          %p350 = pneg %p88
        $region38: #{tpu_custom_call.1} parent=31 // pred_check_branch
          %352 = sbr.rel (%p350) target = $region40
        $region39: #{tpu_custom_call.1} parent=31 // pred_region
          %s353 = sand.u32 %s28, 1
          %s354 = scalar_lea.sflag [#allocation6], %s353
          %s355 = sand.u32 %s78, 1
          %s356 = smul.addr %s355, 8
          %s357 = scalar_lea.vmem [#allocation5], %s356
          %s359 = ssub.s32 128, 128
          %360 = vsyncadd %s354, %s359
          %s361 = smul.addr %s35, 128
          %s362 = scalar_lea.hbm %s1, %s361
          %s364 = sshll.u32 %s357, 4
          %s365 = int_to_ptr.vmem [resolvable:$true] %s364
          %367 = dma.hbm_to_vmem [thread:$0]  %s362, 128, %s365, %s354
        $region40: #{tpu_custom_call.1} parent=31 // pred_fallthru
          _
        // Predicated region
        $region41: #{tpu_custom_call.1} parent=31 // pred_check
          %p368 = pneg %p114
        $region42: #{tpu_custom_call.1} parent=31 // pred_check_branch
          %370 = sbr.rel (%p368) target = $region44
        $region43: #{tpu_custom_call.1} parent=31 // pred_region
          %s371 = sand.u32 %s28, 1
          %s372 = scalar_lea.sflag [#allocation6], %s371
          %s373 = sand.u32 %s104, 1
          %s374 = smul.addr %s373, 8
          %s375 = scalar_lea.vmem [#allocation7], %s374
          %s377 = ssub.s32 128, 128
          %378 = vsyncadd %s372, %s377
          %s379 = smul.addr %s35, 128
          %s380 = scalar_lea.hbm %s2, %s379
          %s382 = sshll.u32 %s375, 4
          %s383 = int_to_ptr.vmem [resolvable:$true] %s382
          %385 = dma.hbm_to_vmem [thread:$0]  %s380, 128, %s383, %s372
        $region44: #{tpu_custom_call.1} parent=31 // pred_fallthru
          _
        // Predicated region
        $region45: #{tpu_custom_call.1} parent=31 // pred_check
          %p386 = pneg %p142
        $region46: #{tpu_custom_call.1} parent=31 // pred_check_branch
          %388 = sbr.rel (%p386) target = $region48
        $region47: #{tpu_custom_call.1} parent=31 // pred_region
          %s389 = sand.u32 %s28, 1
          %s390 = scalar_lea.sflag [#allocation9], %s389
          %s391 = sand.u32 %s132, 1
          %s392 = smul.addr %s391, 8
          %s393 = scalar_lea.vmem [#allocation8], %s392
          %s395 = ssub.s32 128, 128
          %396 = vsyncadd %s390, %s395
          %s397 = sadd.s32 %s36, %s35
          %s398 = smul.addr %s397, 128
          %s399 = scalar_lea.hbm %s3, %s398
          %s401 = sshll.u32 %s393, 4
          %s402 = int_to_ptr.vmem [resolvable:$true] %s401
          %404 = dma.hbm_to_vmem [thread:$0]  %s399, 128, %s402, %s390
        $region48: #{tpu_custom_call.1} parent=31 // pred_fallthru
          _
      $region32: #{tpu_custom_call.1} parent=5 // pred_fallthru
        _
      %p405 = scmp.le.s32.totalorder 1, %s28
      %p406 = scmp.lt.s32.totalorder %s28, 3
      %p407 = pnand %p405, %p406
      %p408 = pneg %p407
      // Predicated region
      $region49: #{tpu_custom_call.1} parent=5 // pred_check
        _
      $region50: #{tpu_custom_call.1} parent=5 // pred_check_branch
        %410 = sbr.rel (%p407) target = $region52
      $region51: #{tpu_custom_call.1} parent=5 // pred_region
        %s411 = ssub.s32 %s28, 1
        %s412 = sand.u32 %s55, 1
        %s413 = scalar_lea.sflag [#allocation3], %s412
        %s414 = sand.u32 %s55, 1
        %s415 = smul.addr %s414, 8
        %s416 = scalar_lea.vmem [#allocation2], %s415
        // Predicated region
        $region53: #{tpu_custom_call.1} parent=51 // pred_check
          %p417 = pneg %p68
        $region54: #{tpu_custom_call.1} parent=51 // pred_check_branch
          %419 = sbr.rel (%p417) target = $region56
        $region55: #{tpu_custom_call.1} parent=51 // pred_region
          %420 = dma.done %s413, 128
        $region56: #{tpu_custom_call.1} parent=51 // pred_fallthru
          _
        %s421 = sand.u32 %s33, 1
        %s422 = scalar_lea.sflag [#allocation6], %s421
        %s423 = sand.u32 %s81, 1
        %s424 = smul.addr %s423, 8
        %s425 = scalar_lea.vmem [#allocation5], %s424
        // Predicated region
        $region57: #{tpu_custom_call.1} parent=51 // pred_check
          %p426 = pneg %p94
        $region58: #{tpu_custom_call.1} parent=51 // pred_check_branch
          %428 = sbr.rel (%p426) target = $region60
        $region59: #{tpu_custom_call.1} parent=51 // pred_region
          %429 = dma.done %s422, 128
        $region60: #{tpu_custom_call.1} parent=51 // pred_fallthru
          _
        %s430 = sand.u32 %s33, 1
        %s431 = scalar_lea.sflag [#allocation6], %s430
        %s432 = sand.u32 %s107, 1
        %s433 = smul.addr %s432, 8
        %s434 = scalar_lea.vmem [#allocation7], %s433
        // Predicated region
        $region61: #{tpu_custom_call.1} parent=51 // pred_check
          %p435 = pneg %p120
        $region62: #{tpu_custom_call.1} parent=51 // pred_check_branch
          %437 = sbr.rel (%p435) target = $region64
        $region63: #{tpu_custom_call.1} parent=51 // pred_region
          %438 = dma.done %s431, 128
        $region64: #{tpu_custom_call.1} parent=51 // pred_fallthru
          _
        %s439 = sand.u32 %s33, 1
        %s440 = scalar_lea.sflag [#allocation9], %s439
        %s441 = sand.u32 %s135, 1
        %s442 = smul.addr %s441, 8
        %s443 = scalar_lea.vmem [#allocation8], %s442
        // Predicated region
        $region65: #{tpu_custom_call.1} parent=51 // pred_check
          %p444 = pneg %p148
        $region66: #{tpu_custom_call.1} parent=51 // pred_check_branch
          %446 = sbr.rel (%p444) target = $region68
        $region67: #{tpu_custom_call.1} parent=51 // pred_region
          %447 = dma.done %s440, 128
        $region68: #{tpu_custom_call.1} parent=51 // pred_fallthru
          _
        // Predicated region
        $region69: #{tpu_custom_call.1} parent=51 // pred_check
          %p448 = pneg %p169
        $region70: #{tpu_custom_call.1} parent=51 // pred_check_branch
          %450 = sbr.rel (%p448) target = $region72
        $region71: #{tpu_custom_call.1} parent=51 // pred_region
          %451 = dma.done [#allocation9], 512
        $region72: #{tpu_custom_call.1} parent=51 // pred_fallthru
          _
        // Predicated region
        $region73: #{tpu_custom_call.1} parent=51 // pred_check
          %p452 = pneg %p190
        $region74: #{tpu_custom_call.1} parent=51 // pred_check_branch
          %454 = sbr.rel (%p452) target = $region76
        $region75: #{tpu_custom_call.1} parent=51 // pred_region
          %455 = dma.done [#allocation12], 512
        $region76: #{tpu_custom_call.1} parent=51 // pred_fallthru
          _
        // Predicated region
        $region77: #{tpu_custom_call.1} parent=51 // pred_check
          %p456 = pneg %p211
        $region78: #{tpu_custom_call.1} parent=51 // pred_check_branch
          %458 = sbr.rel (%p456) target = $region80
        $region79: #{tpu_custom_call.1} parent=51 // pred_region
          %459 = dma.done [#allocation12], 512
        $region80: #{tpu_custom_call.1} parent=51 // pred_fallthru
          _
        // Predicated region
        $region81: #{tpu_custom_call.1} parent=51 // pred_check
          %p460 = pneg %p232
        $region82: #{tpu_custom_call.1} parent=51 // pred_check_branch
          %462 = sbr.rel (%p460) target = $region84
        $region83: #{tpu_custom_call.1} parent=51 // pred_region
          %463 = dma.done [#allocation15], 512
        $region84: #{tpu_custom_call.1} parent=51 // pred_fallthru
          _
        %s464 = sand.u32 %s55, 1
        %s465 = scalar_lea.sflag [#allocation3], %s464
        %s466 = sand.u32 %s55, 1
        %s467 = smul.addr %s466, 8
        %s468 = scalar_lea.vmem [#allocation2], %s467
        %p469 = pneg %p68
        %p470 = pneg %p65
        %s471 = sand.u32 %s33, 1
        %s472 = scalar_lea.sflag [#allocation6], %s471
        %s473 = sand.u32 %s81, 1
        %s474 = smul.addr %s473, 8
        %s475 = scalar_lea.vmem [#allocation5], %s474
        %p476 = pneg %p94
        %p477 = pneg %p91
        %s478 = sand.u32 %s33, 1
        %s479 = scalar_lea.sflag [#allocation6], %s478
        %s480 = sand.u32 %s107, 1
        %s481 = smul.addr %s480, 8
        %s482 = scalar_lea.vmem [#allocation7], %s481
        %p483 = pneg %p120
        %p484 = pneg %p117
        %s485 = sand.u32 %s33, 1
        %s486 = scalar_lea.sflag [#allocation9], %s485
        %s487 = sand.u32 %s135, 1
        %s488 = smul.addr %s487, 8
        %s489 = scalar_lea.vmem [#allocation8], %s488
        %p490 = pneg %p148
        %p491 = pneg %p145
        %p492 = pneg %p169
        %p493 = pneg %p166
        %p494 = pneg %p190
        %p495 = pneg %p187
        %p496 = pneg %p211
        %p497 = pneg %p208
        %p498 = pneg %p232
        %p499 = pneg %p229
        %p500 = pneg %p260
        %p501 = pneg %p257
        %s502 = sand.u32 %s247, 1
        %s503 = scalar_lea.sflag [#allocation4], %s502
        %s504 = sand.u32 %s247, 1
        %s505 = smul.addr %s504, 8
        %s506 = scalar_lea.vmem [#allocation16], %s505
        %v508 = vld [vmem:[%s416] sm:$0xff]
        %v509 = vld [vmem:[%s425] sm:$0xff]
        %v510 = vld [vmem:[%s434] sm:$0xff]
        %v511 = vld [vmem:[%s443] sm:$0xff]
        %vm512 = vcmp.ne.s32.totalorder %v511, 0
        %v513 = vld [vmem:[#allocation10] sm:$0xff]
        %v514 = vld [vmem:[#allocation10 + $0x8] sm:$0xff]
        %v515 = vld [vmem:[#allocation10 + $0x10] sm:$0xff]
        %v516 = vld [vmem:[#allocation10 + $0x18] sm:$0xff]
        %vm517 = vcmask 261120
        %v519 = vsel %vm517, %v508, 0
        %521 = vmatprep.subr.mxu0 0.0
        %522 = vmatpush1.msra.mxu0 0.0
        %523 = vmatprep.subr.mxu0 0.0
        %524 = vmatpush1.msra.mxu0 0.0
        %525 = vmatprep.subr.mxu0 0.0
        %526 = vmatpush1.msra.mxu0 0.0
        %527 = vmatprep.subr.mxu0 0.0
        %528 = vmatpush1.msra.mxu0 0.0
        %529 = vmatprep.subr.mxu0 0.0
        %530 = vmatpush1.msra.mxu0 0.0
        %531 = vmatprep.subr.mxu0 0.0
        %532 = vmatpush1.msra.mxu0 0.0
        %533 = vmatprep.subr.mxu0 0.0
        %534 = vmatpush1.msra.mxu0 0.0
        %535 = vmatprep.subr.mxu0 0.0
        %536 = vmatpush1.msra.mxu0 0.0
        %537 = vmatprep.subr.mxu0 0.0
        %538 = vmatpush1.msra.mxu0 0.0
        %539 = vmatprep.subr.mxu0 0.0
        %540 = vmatpush1.msra.mxu0 0.0
        %541 = vmatprep.subr.mxu0 0.0
        %542 = vmatpush1.msra.mxu0 0.0
        %543 = vmatprep.subr.mxu0 0.0
        %544 = vmatpush1.msra.mxu0 0.0
        %545 = vmatprep.subr.mxu0 0.0
        %546 = vmatpush1.msra.mxu0 %v516
        %547 = vmatprep.subr.mxu0 0.0
        %548 = vmatpush1.msra.mxu0 %v515
        %549 = vmatprep.subr.mxu0 0.0
        %550 = vmatpush1.msra.mxu0 %v514
        %551 = vmatprep.subr.mxu0 0.0
        %552 = vmatpush1.msra.mxu0 %v513
        %553 = vmatprep.subr.mxu0 0.0
        %554 = vmatpush2.msra.mxu0 0.0
        %555 = vmatprep.subr.mxu0 0.0
        %556 = vmatpush2.msra.mxu0 0.0
        %557 = vmatprep.subr.mxu0 0.0
        %558 = vmatpush2.msra.mxu0 0.0
        %559 = vmatprep.subr.mxu0 0.0
        %560 = vmatpush2.msra.mxu0 0.0
        %561 = vmatprep.subr.mxu0 0.0
        %562 = vmatpush2.msra.mxu0 0.0
        %563 = vmatprep.subr.mxu0 0.0
        %564 = vmatpush2.msra.mxu0 0.0
        %565 = vmatprep.subr.mxu0 0.0
        %566 = vmatpush2.msra.mxu0 0.0
        %567 = vmatprep.subr.mxu0 0.0
        %568 = vmatpush2.msra.mxu0 0.0
        %569 = vmatprep.subr.mxu0 0.0
        %570 = vmatpush2.msra.mxu0 0.0
        %571 = vmatprep.subr.mxu0 0.0
        %572 = vmatpush2.msra.mxu0 0.0
        %573 = vmatprep.subr.mxu0 0.0
        %574 = vmatpush2.msra.mxu0 0.0
        %575 = vmatprep.subr.mxu0 0.0
        %576 = vmatpush2.msra.mxu0 0.0
        %577 = vmatprep.subr.mxu0 0.0
        %578 = vmatpush2.msra.mxu0 0.0
        %579 = vmatprep.subr.mxu0 0.0
        %580 = vmatpush2.msra.mxu0 0.0
        %581 = vmatprep.subr.mxu0 0.0
        %582 = vmatpush2.msra.mxu0 0.0
        %583 = vmatprep.subr.mxu0 0.0
        %584 = vmatpush2.msra.mxu0 0.0
        %585 = vmatprep.mubr.f32.mxu0 0.0
        %586 = vmatmul.mubr.f32.gmra.mxu0 %v519
        %v587 = vpop.f32.mrf.mxu0
        %v588 = vadd.f32 0.0, %v587
        %v589 = vpop.f32.mrf.mxu0
        %590 = vdwg.mxu0
        %v591 = vld [vmem:[#allocation11] sm:$0xff]
        %v592 = vld [vmem:[#allocation11 + $0x8] sm:$0xff]
        %v593 = vld [vmem:[#allocation11 + $0x10] sm:$0xff]
        %v594 = vld [vmem:[#allocation11 + $0x18] sm:$0xff]
        %v596 = vsel %vm517, %v509, 0
        %598 = vmatprep.subr.mxu0 0.0
        %599 = vmatpush1.msra.mxu0 0.0
        %600 = vmatprep.subr.mxu0 0.0
        %601 = vmatpush1.msra.mxu0 0.0
        %602 = vmatprep.subr.mxu0 0.0
        %603 = vmatpush1.msra.mxu0 0.0
        %604 = vmatprep.subr.mxu0 0.0
        %605 = vmatpush1.msra.mxu0 0.0
        %606 = vmatprep.subr.mxu0 0.0
        %607 = vmatpush1.msra.mxu0 0.0
        %608 = vmatprep.subr.mxu0 0.0
        %609 = vmatpush1.msra.mxu0 0.0
        %610 = vmatprep.subr.mxu0 0.0
        %611 = vmatpush1.msra.mxu0 0.0
        %612 = vmatprep.subr.mxu0 0.0
        %613 = vmatpush1.msra.mxu0 0.0
        %614 = vmatprep.subr.mxu0 0.0
        %615 = vmatpush1.msra.mxu0 0.0
        %616 = vmatprep.subr.mxu0 0.0
        %617 = vmatpush1.msra.mxu0 0.0
        %618 = vmatprep.subr.mxu0 0.0
        %619 = vmatpush1.msra.mxu0 0.0
        %620 = vmatprep.subr.mxu0 0.0
        %621 = vmatpush1.msra.mxu0 0.0
        %622 = vmatprep.subr.mxu0 0.0
        %623 = vmatpush1.msra.mxu0 %v594
        %624 = vmatprep.subr.mxu0 0.0
        %625 = vmatpush1.msra.mxu0 %v593
        %626 = vmatprep.subr.mxu0 0.0
        %627 = vmatpush1.msra.mxu0 %v592
        %628 = vmatprep.subr.mxu0 0.0
        %629 = vmatpush1.msra.mxu0 %v591
        %630 = vmatprep.subr.mxu0 0.0
        %631 = vmatpush2.msra.mxu0 0.0
        %632 = vmatprep.subr.mxu0 0.0
        %633 = vmatpush2.msra.mxu0 0.0
        %634 = vmatprep.subr.mxu0 0.0
        %635 = vmatpush2.msra.mxu0 0.0
        %636 = vmatprep.subr.mxu0 0.0
        %637 = vmatpush2.msra.mxu0 0.0
        %638 = vmatprep.subr.mxu0 0.0
        %639 = vmatpush2.msra.mxu0 0.0
        %640 = vmatprep.subr.mxu0 0.0
        %641 = vmatpush2.msra.mxu0 0.0
        %642 = vmatprep.subr.mxu0 0.0
        %643 = vmatpush2.msra.mxu0 0.0
        %644 = vmatprep.subr.mxu0 0.0
        %645 = vmatpush2.msra.mxu0 0.0
        %646 = vmatprep.subr.mxu0 0.0
        %647 = vmatpush2.msra.mxu0 0.0
        %648 = vmatprep.subr.mxu0 0.0
        %649 = vmatpush2.msra.mxu0 0.0
        %650 = vmatprep.subr.mxu0 0.0
        %651 = vmatpush2.msra.mxu0 0.0
        %652 = vmatprep.subr.mxu0 0.0
        %653 = vmatpush2.msra.mxu0 0.0
        %654 = vmatprep.subr.mxu0 0.0
        %655 = vmatpush2.msra.mxu0 0.0
        %656 = vmatprep.subr.mxu0 0.0
        %657 = vmatpush2.msra.mxu0 0.0
        %658 = vmatprep.subr.mxu0 0.0
        %659 = vmatpush2.msra.mxu0 0.0
        %660 = vmatprep.subr.mxu0 0.0
        %661 = vmatpush2.msra.mxu0 0.0
        %662 = vmatprep.mubr.f32.mxu0 0.0
        %663 = vmatmul.mubr.f32.gmra.mxu0 %v596
        %v664 = vpop.f32.mrf.mxu0
        %v665 = vadd.f32 0.0, %v664
        %v666 = vpop.f32.mrf.mxu0
        %667 = vdwg.mxu0
        %v668 = vld [vmem:[#allocation13] sm:$0xff]
        %v669 = vld [vmem:[#allocation13 + $0x8] sm:$0xff]
        %v670 = vld [vmem:[#allocation13 + $0x10] sm:$0xff]
        %v671 = vld [vmem:[#allocation13 + $0x18] sm:$0xff]
        %v673 = vsel %vm517, %v510, 0
        %675 = vmatprep.subr.mxu0 0.0
        %676 = vmatpush1.msra.mxu0 0.0
        %677 = vmatprep.subr.mxu0 0.0
        %678 = vmatpush1.msra.mxu0 0.0
        %679 = vmatprep.subr.mxu0 0.0
        %680 = vmatpush1.msra.mxu0 0.0
        %681 = vmatprep.subr.mxu0 0.0
        %682 = vmatpush1.msra.mxu0 0.0
        %683 = vmatprep.subr.mxu0 0.0
        %684 = vmatpush1.msra.mxu0 0.0
        %685 = vmatprep.subr.mxu0 0.0
        %686 = vmatpush1.msra.mxu0 0.0
        %687 = vmatprep.subr.mxu0 0.0
        %688 = vmatpush1.msra.mxu0 0.0
        %689 = vmatprep.subr.mxu0 0.0
        %690 = vmatpush1.msra.mxu0 0.0
        %691 = vmatprep.subr.mxu0 0.0
        %692 = vmatpush1.msra.mxu0 0.0
        %693 = vmatprep.subr.mxu0 0.0
        %694 = vmatpush1.msra.mxu0 0.0
        %695 = vmatprep.subr.mxu0 0.0
        %696 = vmatpush1.msra.mxu0 0.0
        %697 = vmatprep.subr.mxu0 0.0
        %698 = vmatpush1.msra.mxu0 0.0
        %699 = vmatprep.subr.mxu0 0.0
        %700 = vmatpush1.msra.mxu0 %v671
        %701 = vmatprep.subr.mxu0 0.0
        %702 = vmatpush1.msra.mxu0 %v670
        %703 = vmatprep.subr.mxu0 0.0
        %704 = vmatpush1.msra.mxu0 %v669
        %705 = vmatprep.subr.mxu0 0.0
        %706 = vmatpush1.msra.mxu0 %v668
        %707 = vmatprep.subr.mxu0 0.0
        %708 = vmatpush2.msra.mxu0 0.0
        %709 = vmatprep.subr.mxu0 0.0
        %710 = vmatpush2.msra.mxu0 0.0
        %711 = vmatprep.subr.mxu0 0.0
        %712 = vmatpush2.msra.mxu0 0.0
        %713 = vmatprep.subr.mxu0 0.0
        %714 = vmatpush2.msra.mxu0 0.0
        %715 = vmatprep.subr.mxu0 0.0
        %716 = vmatpush2.msra.mxu0 0.0
        %717 = vmatprep.subr.mxu0 0.0
        %718 = vmatpush2.msra.mxu0 0.0
        %719 = vmatprep.subr.mxu0 0.0
        %720 = vmatpush2.msra.mxu0 0.0
        %721 = vmatprep.subr.mxu0 0.0
        %722 = vmatpush2.msra.mxu0 0.0
        %723 = vmatprep.subr.mxu0 0.0
        %724 = vmatpush2.msra.mxu0 0.0
        %725 = vmatprep.subr.mxu0 0.0
        %726 = vmatpush2.msra.mxu0 0.0
        %727 = vmatprep.subr.mxu0 0.0
        %728 = vmatpush2.msra.mxu0 0.0
        %729 = vmatprep.subr.mxu0 0.0
        %730 = vmatpush2.msra.mxu0 0.0
        %731 = vmatprep.subr.mxu0 0.0
        %732 = vmatpush2.msra.mxu0 0.0
        %733 = vmatprep.subr.mxu0 0.0
        %734 = vmatpush2.msra.mxu0 0.0
        %735 = vmatprep.subr.mxu0 0.0
        %736 = vmatpush2.msra.mxu0 0.0
        %737 = vmatprep.subr.mxu0 0.0
        %738 = vmatpush2.msra.mxu0 0.0
        %739 = vmatprep.mubr.f32.mxu0 0.0
        %740 = vmatmul.mubr.f32.gmra.mxu0 %v673
        %v741 = vpop.f32.mrf.mxu0
        %v742 = vadd.f32 0.0, %v741
        %v743 = vpop.f32.mrf.mxu0
        %744 = vdwg.mxu0
        %v745 = vpack.c.bf16 %v588, %v588
        %v746 = vpack.c.bf16 %v665, %v665
        %v747 = vpack.c.bf16 %v742, %v742
        %vm748 = vcmask 64512
        %v750 = vsel %vm748, %v745, 0
        %v753 = vsel %vm748, %v746, 0
        %755 = vmatprep.subr.bf16.mxu0 0
        %756 = vmatpush1.bf16.xpose.msra.mxu0 0
        %757 = vmatprep.subr.bf16.mxu0 0
        %758 = vmatpush1.bf16.xpose.msra.mxu0 0
        %759 = vmatprep.subr.bf16.mxu0 0
        %760 = vmatpush1.bf16.xpose.msra.mxu0 0
        %761 = vmatprep.subr.bf16.mxu0 0
        %762 = vmatpush1.bf16.xpose.msra.mxu0 0
        %763 = vmatprep.subr.bf16.mxu0 0
        %764 = vmatpush1.bf16.xpose.msra.mxu0 0
        %765 = vmatprep.subr.bf16.mxu0 0
        %766 = vmatpush1.bf16.xpose.msra.mxu0 0
        %767 = vmatprep.subr.bf16.mxu0 0
        %768 = vmatpush1.bf16.xpose.msra.mxu0 0
        %769 = vmatprep.subr.bf16.mxu0 0
        %770 = vmatpush1.bf16.xpose.msra.mxu0 %v753
        %771 = vmatprep.subr.bf16.mxu0 0
        %772 = vmatpush2.bf16.xpose.msra.mxu0 0
        %773 = vmatprep.subr.bf16.mxu0 0
        %774 = vmatpush2.bf16.xpose.msra.mxu0 0
        %775 = vmatprep.subr.bf16.mxu0 0
        %776 = vmatpush2.bf16.xpose.msra.mxu0 0
        %777 = vmatprep.subr.bf16.mxu0 0
        %778 = vmatpush2.bf16.xpose.msra.mxu0 0
        %779 = vmatprep.subr.bf16.mxu0 0
        %780 = vmatpush2.bf16.xpose.msra.mxu0 0
        %781 = vmatprep.subr.bf16.mxu0 0
        %782 = vmatpush2.bf16.xpose.msra.mxu0 0
        %783 = vmatprep.subr.bf16.mxu0 0
        %784 = vmatpush2.bf16.xpose.msra.mxu0 0
        %785 = vmatprep.subr.bf16.mxu0 0
        %786 = vmatpush2.bf16.xpose.msra.mxu0 0
        %787 = vmatprep.mubr.bf16.mxu0 0
        %788 = vmatmul.mubr.bf16.gmra.mxu0 %v750
        %v789 = vpop.f32.mrf.mxu0
        %v790 = vadd.f32 0.0, %v789
        %v791 = vpop.f32.mrf.mxu0
        %v792 = vpop.f32.mrf.mxu0
        %v793 = vpop.f32.mrf.mxu0
        %794 = vdwg.mxu0
        %v795 = vsel %vm512, %v790, -1e+09
        %v796 = vsel %vm748, %v795, -inf
        %797 = vmax.xlane.f32.xlu0 %v796
        %v798 = vpop.xlane.xlu0 %797
        %v799 = vsub.f32 %v795, %v798
        %v800 = vmul.f32 %v799, 1.442695
        %v801 = vpow.pop %v800
        %v802 = vsel %vm748, %v801, 0.0
        %803 = vadd.xlane.f32.xlu0 %v802
        %v804 = vpop.xlane.xlu0 %803
        %v805 = vpack.c.bf16 %v801, %v801
        %v807 = vsel %vm748, %v805, 0
        %vm809 = vcmask 1043456
        %v811 = vsel %vm809, %v747, 0
        %813 = vmatprep.subr.bf16.mxu0 0
        %814 = vmatpush1.bf16.msra.mxu0 0
        %815 = vmatprep.subr.bf16.mxu0 0
        %816 = vmatpush1.bf16.msra.mxu0 0
        %817 = vmatprep.subr.bf16.mxu0 0
        %818 = vmatpush1.bf16.msra.mxu0 0
        %819 = vmatprep.subr.bf16.mxu0 0
        %820 = vmatpush1.bf16.msra.mxu0 0
        %821 = vmatprep.subr.bf16.mxu0 0
        %822 = vmatpush1.bf16.msra.mxu0 0
        %823 = vmatprep.subr.bf16.mxu0 0
        %824 = vmatpush1.bf16.msra.mxu0 0
        %825 = vmatprep.subr.bf16.mxu0 0
        %826 = vmatpush1.bf16.msra.mxu0 0
        %827 = vmatprep.subr.bf16.mxu0 0
        %828 = vmatpush1.bf16.msra.mxu0 %v811
        %829 = vmatprep.subr.bf16.mxu0 0
        %830 = vmatpush2.bf16.msra.mxu0 0
        %831 = vmatprep.subr.bf16.mxu0 0
        %832 = vmatpush2.bf16.msra.mxu0 0
        %833 = vmatprep.subr.bf16.mxu0 0
        %834 = vmatpush2.bf16.msra.mxu0 0
        %835 = vmatprep.subr.bf16.mxu0 0
        %836 = vmatpush2.bf16.msra.mxu0 0
        %837 = vmatprep.subr.bf16.mxu0 0
        %838 = vmatpush2.bf16.msra.mxu0 0
        %839 = vmatprep.subr.bf16.mxu0 0
        %840 = vmatpush2.bf16.msra.mxu0 0
        %841 = vmatprep.subr.bf16.mxu0 0
        %842 = vmatpush2.bf16.msra.mxu0 0
        %843 = vmatprep.subr.bf16.mxu0 0
        %844 = vmatpush2.bf16.msra.mxu0 0
        %845 = vmatprep.mubr.bf16.mxu0 0
        %846 = vmatmul.mubr.bf16.gmra.mxu0 %v807
        %v847 = vpop.f32.mrf.mxu0
        %v848 = vadd.f32 0.0, %v847
        %v849 = vpop.f32.mrf.mxu0
        %v850 = vpop.f32.mrf.mxu0
        %v851 = vpop.f32.mrf.mxu0
        %852 = vdwg.mxu0
        %v853 = vrcp.pop %v804
        %v854 = vmul.f32 %v848, %v853
        %856 = vrot.lane.b32.xlu0 %v745, 120
        %v857 = vpop.permute.xlu0 %856
        %859 = vrot.lane.b32.xlu0 %v746, 120
        %v860 = vpop.permute.xlu0 %859
        %v862 = vsel %vm748, %v857, 0
        %v865 = vsel %vm748, %v860, 0
        %867 = vmatprep.subr.bf16.mxu0 0
        %868 = vmatpush1.bf16.xpose.msra.mxu0 0
        %869 = vmatprep.subr.bf16.mxu0 0
        %870 = vmatpush1.bf16.xpose.msra.mxu0 0
        %871 = vmatprep.subr.bf16.mxu0 0
        %872 = vmatpush1.bf16.xpose.msra.mxu0 0
        %873 = vmatprep.subr.bf16.mxu0 0
        %874 = vmatpush1.bf16.xpose.msra.mxu0 0
        %875 = vmatprep.subr.bf16.mxu0 0
        %876 = vmatpush1.bf16.xpose.msra.mxu0 0
        %877 = vmatprep.subr.bf16.mxu0 0
        %878 = vmatpush1.bf16.xpose.msra.mxu0 0
        %879 = vmatprep.subr.bf16.mxu0 0
        %880 = vmatpush1.bf16.xpose.msra.mxu0 0
        %881 = vmatprep.subr.bf16.mxu0 0
        %882 = vmatpush1.bf16.xpose.msra.mxu0 %v865
        %883 = vmatprep.subr.bf16.mxu0 0
        %884 = vmatpush2.bf16.xpose.msra.mxu0 0
        %885 = vmatprep.subr.bf16.mxu0 0
        %886 = vmatpush2.bf16.xpose.msra.mxu0 0
        %887 = vmatprep.subr.bf16.mxu0 0
        %888 = vmatpush2.bf16.xpose.msra.mxu0 0
        %889 = vmatprep.subr.bf16.mxu0 0
        %890 = vmatpush2.bf16.xpose.msra.mxu0 0
        %891 = vmatprep.subr.bf16.mxu0 0
        %892 = vmatpush2.bf16.xpose.msra.mxu0 0
        %893 = vmatprep.subr.bf16.mxu0 0
        %894 = vmatpush2.bf16.xpose.msra.mxu0 0
        %895 = vmatprep.subr.bf16.mxu0 0
        %896 = vmatpush2.bf16.xpose.msra.mxu0 0
        %897 = vmatprep.subr.bf16.mxu0 0
        %898 = vmatpush2.bf16.xpose.msra.mxu0 0
        %899 = vmatprep.mubr.bf16.mxu0 0
        %900 = vmatmul.mubr.bf16.gmra.mxu0 %v862
        %v901 = vpop.f32.mrf.mxu0
        %v902 = vadd.f32 0.0, %v901
        %v903 = vpop.f32.mrf.mxu0
        %v904 = vpop.f32.mrf.mxu0
        %v905 = vpop.f32.mrf.mxu0
        %906 = vdwg.mxu0
        %v907 = vsel %vm512, %v902, -1e+09
        %v908 = vsel %vm748, %v907, -inf
        %909 = vmax.xlane.f32.xlu0 %v908
        %v910 = vpop.xlane.xlu0 %909
        %v911 = vsub.f32 %v907, %v910
        %v912 = vmul.f32 %v911, 1.442695
        %v913 = vpow.pop %v912
        %v914 = vsel %vm748, %v913, 0.0
        %915 = vadd.xlane.f32.xlu0 %v914
        %v916 = vpop.xlane.xlu0 %915
        %v917 = vpack.c.bf16 %v913, %v913
        %919 = vrot.lane.b32.xlu0 %v747, 120
        %v920 = vpop.permute.xlu0 %919
        %v922 = vsel %vm748, %v917, 0
        %v925 = vsel %vm809, %v920, 0
        %927 = vmatprep.subr.bf16.mxu0 0
        %928 = vmatpush1.bf16.msra.mxu0 0
        %929 = vmatprep.subr.bf16.mxu0 0
        %930 = vmatpush1.bf16.msra.mxu0 0
        %931 = vmatprep.subr.bf16.mxu0 0
        %932 = vmatpush1.bf16.msra.mxu0 0
        %933 = vmatprep.subr.bf16.mxu0 0
        %934 = vmatpush1.bf16.msra.mxu0 0
        %935 = vmatprep.subr.bf16.mxu0 0
        %936 = vmatpush1.bf16.msra.mxu0 0
        %937 = vmatprep.subr.bf16.mxu0 0
        %938 = vmatpush1.bf16.msra.mxu0 0
        %939 = vmatprep.subr.bf16.mxu0 0
        %940 = vmatpush1.bf16.msra.mxu0 0
        %941 = vmatprep.subr.bf16.mxu0 0
        %942 = vmatpush1.bf16.msra.mxu0 %v925
        %943 = vmatprep.subr.bf16.mxu0 0
        %944 = vmatpush2.bf16.msra.mxu0 0
        %945 = vmatprep.subr.bf16.mxu0 0
        %946 = vmatpush2.bf16.msra.mxu0 0
        %947 = vmatprep.subr.bf16.mxu0 0
        %948 = vmatpush2.bf16.msra.mxu0 0
        %949 = vmatprep.subr.bf16.mxu0 0
        %950 = vmatpush2.bf16.msra.mxu0 0
        %951 = vmatprep.subr.bf16.mxu0 0
        %952 = vmatpush2.bf16.msra.mxu0 0
        %953 = vmatprep.subr.bf16.mxu0 0
        %954 = vmatpush2.bf16.msra.mxu0 0
        %955 = vmatprep.subr.bf16.mxu0 0
        %956 = vmatpush2.bf16.msra.mxu0 0
        %957 = vmatprep.subr.bf16.mxu0 0
        %958 = vmatpush2.bf16.msra.mxu0 0
        %959 = vmatprep.mubr.bf16.mxu0 0
        %960 = vmatmul.mubr.bf16.gmra.mxu0 %v922
        %v961 = vpop.f32.mrf.mxu0
        %v962 = vadd.f32 0.0, %v961
        %v963 = vpop.f32.mrf.mxu0
        %v964 = vpop.f32.mrf.mxu0
        %v965 = vpop.f32.mrf.mxu0
        %966 = vdwg.mxu0
        %v967 = vrcp.pop %v916
        %v968 = vmul.f32 %v962, %v967
        %969 = vrot.lane.b32.xlu0 %v745, 112
        %v970 = vpop.permute.xlu0 %969
        %971 = vrot.lane.b32.xlu0 %v746, 112
        %v972 = vpop.permute.xlu0 %971
        %v974 = vsel %vm748, %v970, 0
        %v977 = vsel %vm748, %v972, 0
        %979 = vmatprep.subr.bf16.mxu0 0
        %980 = vmatpush1.bf16.xpose.msra.mxu0 0
        %981 = vmatprep.subr.bf16.mxu0 0
        %982 = vmatpush1.bf16.xpose.msra.mxu0 0
        %983 = vmatprep.subr.bf16.mxu0 0
        %984 = vmatpush1.bf16.xpose.msra.mxu0 0
        %985 = vmatprep.subr.bf16.mxu0 0
        %986 = vmatpush1.bf16.xpose.msra.mxu0 0
        %987 = vmatprep.subr.bf16.mxu0 0
        %988 = vmatpush1.bf16.xpose.msra.mxu0 0
        %989 = vmatprep.subr.bf16.mxu0 0
        %990 = vmatpush1.bf16.xpose.msra.mxu0 0
        %991 = vmatprep.subr.bf16.mxu0 0
        %992 = vmatpush1.bf16.xpose.msra.mxu0 0
        %993 = vmatprep.subr.bf16.mxu0 0
        %994 = vmatpush1.bf16.xpose.msra.mxu0 %v977
        %995 = vmatprep.subr.bf16.mxu0 0
        %996 = vmatpush2.bf16.xpose.msra.mxu0 0
        %997 = vmatprep.subr.bf16.mxu0 0
        %998 = vmatpush2.bf16.xpose.msra.mxu0 0
        %999 = vmatprep.subr.bf16.mxu0 0
        %1000 = vmatpush2.bf16.xpose.msra.mxu0 0
        %1001 = vmatprep.subr.bf16.mxu0 0
        %1002 = vmatpush2.bf16.xpose.msra.mxu0 0
        %1003 = vmatprep.subr.bf16.mxu0 0
        %1004 = vmatpush2.bf16.xpose.msra.mxu0 0
        %1005 = vmatprep.subr.bf16.mxu0 0
        %1006 = vmatpush2.bf16.xpose.msra.mxu0 0
        %1007 = vmatprep.subr.bf16.mxu0 0
        %1008 = vmatpush2.bf16.xpose.msra.mxu0 0
        %1009 = vmatprep.subr.bf16.mxu0 0
        %1010 = vmatpush2.bf16.xpose.msra.mxu0 0
        %1011 = vmatprep.mubr.bf16.mxu0 0
        %1012 = vmatmul.mubr.bf16.gmra.mxu0 %v974
        %v1013 = vpop.f32.mrf.mxu0
        %v1014 = vadd.f32 0.0, %v1013
        %v1015 = vpop.f32.mrf.mxu0
        %v1016 = vpop.f32.mrf.mxu0
        %v1017 = vpop.f32.mrf.mxu0
        %1018 = vdwg.mxu0
        %v1019 = vsel %vm512, %v1014, -1e+09
        %v1020 = vsel %vm748, %v1019, -inf
        %1021 = vmax.xlane.f32.xlu0 %v1020
        %v1022 = vpop.xlane.xlu0 %1021
        %v1023 = vsub.f32 %v1019, %v1022
        %v1024 = vmul.f32 %v1023, 1.442695
        %v1025 = vpow.pop %v1024
        %v1026 = vsel %vm748, %v1025, 0.0
        %1027 = vadd.xlane.f32.xlu0 %v1026
        %v1028 = vpop.xlane.xlu0 %1027
        %v1029 = vpack.c.bf16 %v1025, %v1025
        %1030 = vrot.lane.b32.xlu0 %v747, 112
        %v1031 = vpop.permute.xlu0 %1030
        %v1033 = vsel %vm748, %v1029, 0
        %v1036 = vsel %vm809, %v1031, 0
        %1038 = vmatprep.subr.bf16.mxu0 0
        %1039 = vmatpush1.bf16.msra.mxu0 0
        %1040 = vmatprep.subr.bf16.mxu0 0
        %1041 = vmatpush1.bf16.msra.mxu0 0
        %1042 = vmatprep.subr.bf16.mxu0 0
        %1043 = vmatpush1.bf16.msra.mxu0 0
        %1044 = vmatprep.subr.bf16.mxu0 0
        %1045 = vmatpush1.bf16.msra.mxu0 0
        %1046 = vmatprep.subr.bf16.mxu0 0
        %1047 = vmatpush1.bf16.msra.mxu0 0
        %1048 = vmatprep.subr.bf16.mxu0 0
        %1049 = vmatpush1.bf16.msra.mxu0 0
        %1050 = vmatprep.subr.bf16.mxu0 0
        %1051 = vmatpush1.bf16.msra.mxu0 0
        %1052 = vmatprep.subr.bf16.mxu0 0
        %1053 = vmatpush1.bf16.msra.mxu0 %v1036
        %1054 = vmatprep.subr.bf16.mxu0 0
        %1055 = vmatpush2.bf16.msra.mxu0 0
        %1056 = vmatprep.subr.bf16.mxu0 0
        %1057 = vmatpush2.bf16.msra.mxu0 0
        %1058 = vmatprep.subr.bf16.mxu0 0
        %1059 = vmatpush2.bf16.msra.mxu0 0
        %1060 = vmatprep.subr.bf16.mxu0 0
        %1061 = vmatpush2.bf16.msra.mxu0 0
        %1062 = vmatprep.subr.bf16.mxu0 0
        %1063 = vmatpush2.bf16.msra.mxu0 0
        %1064 = vmatprep.subr.bf16.mxu0 0
        %1065 = vmatpush2.bf16.msra.mxu0 0
        %1066 = vmatprep.subr.bf16.mxu0 0
        %1067 = vmatpush2.bf16.msra.mxu0 0
        %1068 = vmatprep.subr.bf16.mxu0 0
        %1069 = vmatpush2.bf16.msra.mxu0 0
        %1070 = vmatprep.mubr.bf16.mxu0 0
        %1071 = vmatmul.mubr.bf16.gmra.mxu0 %v1033
        %v1072 = vpop.f32.mrf.mxu0
        %v1073 = vadd.f32 0.0, %v1072
        %v1074 = vpop.f32.mrf.mxu0
        %v1075 = vpop.f32.mrf.mxu0
        %v1076 = vpop.f32.mrf.mxu0
        %1077 = vdwg.mxu0
        %v1078 = vrcp.pop %v1028
        %v1079 = vmul.f32 %v1073, %v1078
        %1080 = vrot.lane.b32.xlu0 %v745, 104
        %v1081 = vpop.permute.xlu0 %1080
        %1082 = vrot.lane.b32.xlu0 %v746, 104
        %v1083 = vpop.permute.xlu0 %1082
        %v1085 = vsel %vm748, %v1081, 0
        %v1088 = vsel %vm748, %v1083, 0
        %1090 = vmatprep.subr.bf16.mxu0 0
        %1091 = vmatpush1.bf16.xpose.msra.mxu0 0
        %1092 = vmatprep.subr.bf16.mxu0 0
        %1093 = vmatpush1.bf16.xpose.msra.mxu0 0
        %1094 = vmatprep.subr.bf16.mxu0 0
        %1095 = vmatpush1.bf16.xpose.msra.mxu0 0
        %1096 = vmatprep.subr.bf16.mxu0 0
        %1097 = vmatpush1.bf16.xpose.msra.mxu0 0
        %1098 = vmatprep.subr.bf16.mxu0 0
        %1099 = vmatpush1.bf16.xpose.msra.mxu0 0
        %1100 = vmatprep.subr.bf16.mxu0 0
        %1101 = vmatpush1.bf16.xpose.msra.mxu0 0
        %1102 = vmatprep.subr.bf16.mxu0 0
        %1103 = vmatpush1.bf16.xpose.msra.mxu0 0
        %1104 = vmatprep.subr.bf16.mxu0 0
        %1105 = vmatpush1.bf16.xpose.msra.mxu0 %v1088
        %1106 = vmatprep.subr.bf16.mxu0 0
        %1107 = vmatpush2.bf16.xpose.msra.mxu0 0
        %1108 = vmatprep.subr.bf16.mxu0 0
        %1109 = vmatpush2.bf16.xpose.msra.mxu0 0
        %1110 = vmatprep.subr.bf16.mxu0 0
        %1111 = vmatpush2.bf16.xpose.msra.mxu0 0
        %1112 = vmatprep.subr.bf16.mxu0 0
        %1113 = vmatpush2.bf16.xpose.msra.mxu0 0
        %1114 = vmatprep.subr.bf16.mxu0 0
        %1115 = vmatpush2.bf16.xpose.msra.mxu0 0
        %1116 = vmatprep.subr.bf16.mxu0 0
        %1117 = vmatpush2.bf16.xpose.msra.mxu0 0
        %1118 = vmatprep.subr.bf16.mxu0 0
        %1119 = vmatpush2.bf16.xpose.msra.mxu0 0
        %1120 = vmatprep.subr.bf16.mxu0 0
        %1121 = vmatpush2.bf16.xpose.msra.mxu0 0
        %1122 = vmatprep.mubr.bf16.mxu0 0
        %1123 = vmatmul.mubr.bf16.gmra.mxu0 %v1085
        %v1124 = vpop.f32.mrf.mxu0
        %v1125 = vadd.f32 0.0, %v1124
        %v1126 = vpop.f32.mrf.mxu0
        %v1127 = vpop.f32.mrf.mxu0
        %v1128 = vpop.f32.mrf.mxu0
        %1129 = vdwg.mxu0
        %v1130 = vsel %vm512, %v1125, -1e+09
        %v1131 = vsel %vm748, %v1130, -inf
        %1132 = vmax.xlane.f32.xlu0 %v1131
        %v1133 = vpop.xlane.xlu0 %1132
        %v1134 = vsub.f32 %v1130, %v1133
        %v1135 = vmul.f32 %v1134, 1.442695
        %v1136 = vpow.pop %v1135
        %v1137 = vsel %vm748, %v1136, 0.0
        %1138 = vadd.xlane.f32.xlu0 %v1137
        %v1139 = vpop.xlane.xlu0 %1138
        %v1140 = vpack.c.bf16 %v1136, %v1136
        %1141 = vrot.lane.b32.xlu0 %v747, 104
        %v1142 = vpop.permute.xlu0 %1141
        %v1144 = vsel %vm748, %v1140, 0
        %v1147 = vsel %vm809, %v1142, 0
        %1149 = vmatprep.subr.bf16.mxu0 0
        %1150 = vmatpush1.bf16.msra.mxu0 0
        %1151 = vmatprep.subr.bf16.mxu0 0
        %1152 = vmatpush1.bf16.msra.mxu0 0
        %1153 = vmatprep.subr.bf16.mxu0 0
        %1154 = vmatpush1.bf16.msra.mxu0 0
        %1155 = vmatprep.subr.bf16.mxu0 0
        %1156 = vmatpush1.bf16.msra.mxu0 0
        %1157 = vmatprep.subr.bf16.mxu0 0
        %1158 = vmatpush1.bf16.msra.mxu0 0
        %1159 = vmatprep.subr.bf16.mxu0 0
        %1160 = vmatpush1.bf16.msra.mxu0 0
        %1161 = vmatprep.subr.bf16.mxu0 0
        %1162 = vmatpush1.bf16.msra.mxu0 0
        %1163 = vmatprep.subr.bf16.mxu0 0
        %1164 = vmatpush1.bf16.msra.mxu0 %v1147
        %1165 = vmatprep.subr.bf16.mxu0 0
        %1166 = vmatpush2.bf16.msra.mxu0 0
        %1167 = vmatprep.subr.bf16.mxu0 0
        %1168 = vmatpush2.bf16.msra.mxu0 0
        %1169 = vmatprep.subr.bf16.mxu0 0
        %1170 = vmatpush2.bf16.msra.mxu0 0
        %1171 = vmatprep.subr.bf16.mxu0 0
        %1172 = vmatpush2.bf16.msra.mxu0 0
        %1173 = vmatprep.subr.bf16.mxu0 0
        %1174 = vmatpush2.bf16.msra.mxu0 0
        %1175 = vmatprep.subr.bf16.mxu0 0
        %1176 = vmatpush2.bf16.msra.mxu0 0
        %1177 = vmatprep.subr.bf16.mxu0 0
        %1178 = vmatpush2.bf16.msra.mxu0 0
        %1179 = vmatprep.subr.bf16.mxu0 0
        %1180 = vmatpush2.bf16.msra.mxu0 0
        %1181 = vmatprep.mubr.bf16.mxu0 0
        %1182 = vmatmul.mubr.bf16.gmra.mxu0 %v1144
        %v1183 = vpop.f32.mrf.mxu0
        %v1184 = vadd.f32 0.0, %v1183
        %v1185 = vpop.f32.mrf.mxu0
        %v1186 = vpop.f32.mrf.mxu0
        %v1187 = vpop.f32.mrf.mxu0
        %1188 = vdwg.mxu0
        %v1189 = vrcp.pop %v1139
        %v1190 = vmul.f32 %v1184, %v1189
        %1192 = vrot.lane.b32.xlu0 %v968, 8
        %v1193 = vpop.permute.xlu0 %1192
        %1196 = vrot.lane.b32.xlu0 %v1079, 16
        %v1197 = vpop.permute.xlu0 %1196
        %1200 = vrot.lane.b32.xlu0 %v1190, 24
        %v1201 = vpop.permute.xlu0 %1200
        %v1203 = vsel %vm748, %v854, %v1193
        %vm1204 = vcmask 130048
        %v1205 = vsel %vm1204, %v1203, %v1197
        %vm1206 = vcmask 195584
        %v1207 = vsel %vm1206, %v1205, %v1201
        %v1208 = vld [vmem:[#allocation14] sm:$0xff]
        %v1209 = vld [vmem:[#allocation14 + $0x8] sm:$0xff]
        %v1210 = vld [vmem:[#allocation14 + $0x10] sm:$0xff]
        %v1211 = vld [vmem:[#allocation14 + $0x18] sm:$0xff]
        %v1213 = vsel %vm517, %v1207, 0
        %1215 = vmatprep.subr.mxu0 0.0
        %1216 = vmatpush1.msra.mxu0 0.0
        %1217 = vmatprep.subr.mxu0 0.0
        %1218 = vmatpush1.msra.mxu0 0.0
        %1219 = vmatprep.subr.mxu0 0.0
        %1220 = vmatpush1.msra.mxu0 0.0
        %1221 = vmatprep.subr.mxu0 0.0
        %1222 = vmatpush1.msra.mxu0 0.0
        %1223 = vmatprep.subr.mxu0 0.0
        %1224 = vmatpush1.msra.mxu0 0.0
        %1225 = vmatprep.subr.mxu0 0.0
        %1226 = vmatpush1.msra.mxu0 0.0
        %1227 = vmatprep.subr.mxu0 0.0
        %1228 = vmatpush1.msra.mxu0 0.0
        %1229 = vmatprep.subr.mxu0 0.0
        %1230 = vmatpush1.msra.mxu0 0.0
        %1231 = vmatprep.subr.mxu0 0.0
        %1232 = vmatpush1.msra.mxu0 0.0
        %1233 = vmatprep.subr.mxu0 0.0
        %1234 = vmatpush1.msra.mxu0 0.0
        %1235 = vmatprep.subr.mxu0 0.0
        %1236 = vmatpush1.msra.mxu0 0.0
        %1237 = vmatprep.subr.mxu0 0.0
        %1238 = vmatpush1.msra.mxu0 0.0
        %1239 = vmatprep.subr.mxu0 0.0
        %1240 = vmatpush1.msra.mxu0 %v1211
        %1241 = vmatprep.subr.mxu0 0.0
        %1242 = vmatpush1.msra.mxu0 %v1210
        %1243 = vmatprep.subr.mxu0 0.0
        %1244 = vmatpush1.msra.mxu0 %v1209
        %1245 = vmatprep.subr.mxu0 0.0
        %1246 = vmatpush1.msra.mxu0 %v1208
        %1247 = vmatprep.subr.mxu0 0.0
        %1248 = vmatpush2.msra.mxu0 0.0
        %1249 = vmatprep.subr.mxu0 0.0
        %1250 = vmatpush2.msra.mxu0 0.0
        %1251 = vmatprep.subr.mxu0 0.0
        %1252 = vmatpush2.msra.mxu0 0.0
        %1253 = vmatprep.subr.mxu0 0.0
        %1254 = vmatpush2.msra.mxu0 0.0
        %1255 = vmatprep.subr.mxu0 0.0
        %1256 = vmatpush2.msra.mxu0 0.0
        %1257 = vmatprep.subr.mxu0 0.0
        %1258 = vmatpush2.msra.mxu0 0.0
        %1259 = vmatprep.subr.mxu0 0.0
        %1260 = vmatpush2.msra.mxu0 0.0
        %1261 = vmatprep.subr.mxu0 0.0
        %1262 = vmatpush2.msra.mxu0 0.0
        %1263 = vmatprep.subr.mxu0 0.0
        %1264 = vmatpush2.msra.mxu0 0.0
        %1265 = vmatprep.subr.mxu0 0.0
        %1266 = vmatpush2.msra.mxu0 0.0
        %1267 = vmatprep.subr.mxu0 0.0
        %1268 = vmatpush2.msra.mxu0 0.0
        %1269 = vmatprep.subr.mxu0 0.0
        %1270 = vmatpush2.msra.mxu0 0.0
        %1271 = vmatprep.subr.mxu0 0.0
        %1272 = vmatpush2.msra.mxu0 0.0
        %1273 = vmatprep.subr.mxu0 0.0
        %1274 = vmatpush2.msra.mxu0 0.0
        %1275 = vmatprep.subr.mxu0 0.0
        %1276 = vmatpush2.msra.mxu0 0.0
        %1277 = vmatprep.subr.mxu0 0.0
        %1278 = vmatpush2.msra.mxu0 0.0
        %1279 = vmatprep.mubr.f32.mxu0 0.0
        %1280 = vmatmul.mubr.f32.gmra.mxu0 %v1213
        %v1281 = vpop.f32.mrf.mxu0
        %v1282 = vadd.f32 0.0, %v1281
        %v1283 = vpop.f32.mrf.mxu0
        %1284 = vdwg.mxu0
        %1285 = vst.msk [vmem:[%s506] sm:$0xff] %vm517, %v1282
        %s1286 = sand.u32 %s247, 1
        %s1287 = scalar_lea.sflag [#allocation4], %s1286
        %s1288 = sand.u32 %s247, 1
        %s1289 = smul.addr %s1288, 8
        %s1290 = scalar_lea.vmem [#allocation16], %s1289
        // Predicated region
        $region85: #{tpu_custom_call.1} parent=51 // pred_check
          %p1291 = pneg %p257
        $region86: #{tpu_custom_call.1} parent=51 // pred_check_branch
          %1293 = sbr.rel (%p1291) target = $region88
        $region87: #{tpu_custom_call.1} parent=51 // pred_region
          %s1295 = ssub.s32 128, 128
          %1296 = vsyncadd %s1287, %s1295
          %s1297 = sadd.s32 %s38, %s37
          %s1298 = smul.addr %s1297, 128
          %s1299 = scalar_lea.hbm %s8, %s1298
          %s1301 = sshll.u32 %s1290, 4
          %s1302 = int_to_ptr.vmem [resolvable:$true] %s1301
          %1304 = dma.vmem_to_hbm [thread:$0]  %s1302, 128, %s1299, %s1287
        $region88: #{tpu_custom_call.1} parent=51 // pred_fallthru
          _
      $region52: #{tpu_custom_call.1} parent=5 // pred_fallthru
        _
      %p1305 = scmp.le.s32.totalorder 2, %s28
      // Predicated region
      $region89: #{tpu_custom_call.1} parent=5 // pred_check
        %p1306 = pneg %p1305
      $region90: #{tpu_custom_call.1} parent=5 // pred_check_branch
        %1308 = sbr.rel (%p1306) target = $region92
      $region91: #{tpu_custom_call.1} parent=5 // pred_region
        %s1309 = ssub.s32 %s28, 2
        // Predicated region
        $region93: #{tpu_custom_call.1} parent=91 // pred_check
          %p1310 = pneg %p263
        $region94: #{tpu_custom_call.1} parent=91 // pred_check_branch
          %1312 = sbr.rel (%p1310) target = $region96
        $region95: #{tpu_custom_call.1} parent=91 // pred_region
          %s1313 = sand.u32 %s248, 1
          %s1314 = scalar_lea.sflag [#allocation4], %s1313
          %s1315 = sand.u32 %s248, 1
          %s1316 = smul.addr %s1315, 8
          %s1317 = scalar_lea.vmem [#allocation16], %s1316
          %1318 = dma.done %s1314, 128
        $region96: #{tpu_custom_call.1} parent=91 // pred_fallthru
          _
      $region92: #{tpu_custom_call.1} parent=5 // pred_fallthru
        _
    $region6: #{tpu_custom_call.1} parent=1 // loop_footer
      %s32 = sadd.s32 1, %s28
    $region7: #{tpu_custom_call.1} parent=1 // loop_footer_branch
      %27 = sbr.rel target = $region3
    $region8: #{tpu_custom_call.1} parent=1 // loop_exit
      _
    %1319 = vsyncpa [#allocation3], 1
    %s1320 = scalar_lea.sflag [#allocation3], 1
    %1321 = vsyncpa %s1320, 1
    %1322 = vsyncpa [#allocation6], 1
    %s1323 = scalar_lea.sflag [#allocation6], 1
    %1324 = vsyncpa %s1323, 1
    %1325 = vsyncpa [#allocation9], 1
    %s1326 = scalar_lea.sflag [#allocation9], 1
    %1327 = vsyncpa %s1326, 1
    %1328 = vsyncpa [#allocation12], 1
    %1329 = vsyncpa [#allocation15], 1
    %1330 = vsyncpa [#allocation4], 1
    %s1331 = scalar_lea.sflag [#allocation4], 1
    %1332 = vsyncpa %s1331, 1

</llo_original>
